<compile_context>
chip_gen: v5e
topology: v5e:2x2
jax: 0.10.0
libtpu: 0.0.40
codegen_flags: <defaults>
</compile_context>

<pallas_src>
import functools

import jax
import jax.numpy as jnp
from jax.experimental import pallas as pl
from jax.experimental.pallas import tpu as pltpu


def _round_up(x, m):
    return ((x + m - 1) // m) * m


def _gru_seq_kernel(x_ref, wi_ref, wh_ref, bi_ref, bhn_ref, out_ref,
                    *, seq_len, batch, hidden, gate_pad):
    """Entire GRU recurrence in a single kernel invocation.

    x_ref  : (B*T, I)    batch-first flattened inputs (f32, cast in-kernel)
    wi_ref : (I, 3*GP)   fused input weights, gate blocks [r | z | n], each
                         padded to GP=128 lanes (bf16)
    wh_ref : (GP, 3*GP)  fused hidden weights, same gate padding (f32)
    bi_ref : (1, 3*GP)   folded biases [b_ir+b_hr | b_iz+b_hz | b_in] (f32)
    bhn_ref: (1, 3*GP)   [0 | 0 | b_hn] (f32)
    out_ref: (B, T*H)    batch-first output slab (f32)
    """
    T, B, H, GP = seq_len, batch, hidden, gate_pad

    # Hoisted, time-parallel input projection: ONE MXU matmul for ALL steps.
    x_bf = x_ref[...].astype(jnp.bfloat16)                       # (B*T, I)
    gi_all = jnp.dot(x_bf, wi_ref[...],
                     preferred_element_type=jnp.float32) + bi_ref[...]  # (B*T, 3*GP)
    # Batch-first row order -> layout-preserving split of the leading dim.
    gi_b = gi_all.reshape(B, T, 3 * GP)

    wh = wh_ref[...]                                             # (GP, 3*GP) f32
    # Hoisted broadcast (JAX does not CSE broadcast_in_dim across the unroll).
    bhn = jnp.broadcast_to(bhn_ref[...], (B, 3 * GP))

    # Per-step input-gate slabs. They depend only on gi_all (not on the
    # recurrence), so these extracts sit off the serial critical path and can
    # be overlapped with earlier time steps by the scheduler.
    gi_steps = [gi_b[:, t, :] for t in range(T)]

    # Serial recurrence, static unroll (T is small & static). Hidden path kept
    # in f32 so quantization error does not compound through the recurrence.
    # TODO(synk): on v5e/v6e, hold Wh stationary in the MXU across the loop
    # (pltpu.matmul_push_rhs once + matmul_acc_lhs/matmul_pop per step).
    h = jnp.zeros((B, GP), jnp.float32)   # padded lanes stay exactly 0
    hs = []
    for t in range(T):
        gi_t = gi_steps[t]                                       # (B, 3*GP)
        gh = jnp.dot(h, wh, preferred_element_type=jnp.float32) + bhn
        # 128-aligned gate slices: free static views thanks to gate padding.
        r = jax.nn.sigmoid(gi_t[:, 0:GP] + gh[:, 0:GP])
        z = jax.nn.sigmoid(gi_t[:, GP:2 * GP] + gh[:, GP:2 * GP])
        n = jnp.tanh(gi_t[:, 2 * GP:3 * GP] + r * gh[:, 2 * GP:3 * GP])
        h = n + z * (h - n)                                      # == (1-z)*n + z*h
        hs.append(h[:, :H])

    # ONE lane-dense store of the whole batch-first output slab (B, T*H).
    out_ref[...] = jnp.concatenate(hs, axis=1).astype(out_ref.dtype)


@functools.partial(jax.jit, static_argnames=("hidden_size",))
def gru_encoder_forward(x_btI, w_ih, w_hh, b_ih, b_hh, *, hidden_size):
    """Equivalent of Encoder.forward (1 layer, unidirectional, batch_first).

    x_btI : (B, T, I) batch-first input
    w_ih  : (3H, I)   PyTorch weight_ih_l0, gate order [r, z, n]
    w_hh  : (3H, H)   PyTorch weight_hh_l0
    b_ih  : (3H,)     PyTorch bias_ih_l0
    b_hh  : (3H,)     PyTorch bias_hh_l0
    returns (B, T, H)
    """
    B, T, I = x_btI.shape
    H = hidden_size
    GP = _round_up(H, 128)   # per-gate lane padding -> 128-aligned gate slices

    # One-time parameter packing (weight-side glue; in real use this is done
    # once at parameter-load time, not per forward). Gate order is [r | z | n].
    def pack_w(w, in_dim):
        wg = jnp.transpose(w.reshape(3, H, in_dim), (0, 2, 1))    # (3, in_dim, H)
        wg = jnp.pad(wg, ((0, 0), (0, 0), (0, GP - H)))           # (3, in_dim, GP)
        return jnp.transpose(wg, (1, 0, 2)).reshape(in_dim, 3 * GP)

    wi_p = pack_w(w_ih, I).astype(jnp.bfloat16)                                # (I, 3*GP)
    wh_p = jnp.pad(pack_w(w_hh, H), ((0, GP - H), (0, 0))).astype(jnp.float32)  # (GP, 3*GP)

    def pad_gate(v):
        return jnp.pad(v, (0, GP - H))

    # r/z biases folded into the input projection; b_hn stays on the hidden
    # path (it is multiplied by r inside the n gate).
    bi_p = jnp.concatenate([
        pad_gate(b_ih[0:H] + b_hh[0:H]),
        pad_gate(b_ih[H:2 * H] + b_hh[H:2 * H]),
        pad_gate(b_ih[2 * H:3 * H]),
    ]).reshape(1, 3 * GP).astype(jnp.float32)
    bhn_p = jnp.concatenate([
        jnp.zeros((2 * GP,), jnp.float32),
        pad_gate(b_hh[2 * H:3 * H]).astype(jnp.float32),
    ]).reshape(1, 3 * GP)

    # Batch-first flatten is a FREE reshape (no transpose / HBM round trip).
    x_flat = x_btI.reshape(B * T, I)

    kernel = functools.partial(_gru_seq_kernel, seq_len=T, batch=B, hidden=H,
                               gate_pad=GP)

    out_flat = pl.pallas_call(
        kernel,
        out_shape=jax.ShapeDtypeStruct((B, T * H), jnp.float32),
        grid=(1,),  # single invocation: everything VMEM-resident
        # TODO(synk): for production-sized B/T, add a "parallel" batch grid axis
        # (v7x megacore) and chunk the hoisted input projection over time blocks
        # for v7x's 64 MiB VMEM (set vmem_limit_bytes accordingly).
        in_specs=[
            pl.BlockSpec((B * T, I), lambda i: (0, 0)),      # x (batch-first flat)
            pl.BlockSpec((I, 3 * GP), lambda i: (0, 0)),     # Wi (gate-padded)
            pl.BlockSpec((GP, 3 * GP), lambda i: (0, 0)),    # Wh (gate-padded)
            pl.BlockSpec((1, 3 * GP), lambda i: (0, 0)),     # folded biases
            pl.BlockSpec((1, 3 * GP), lambda i: (0, 0)),     # [0 | 0 | b_hn]
        ],
        out_specs=pl.BlockSpec((B, T * H), lambda i: (0, 0)),
        compiler_params=pltpu.CompilerParams(
            dimension_semantics=("arbitrary",),
        ),
    )(x_flat, wi_p, wh_p, bi_p, bhn_p)

    # Free reshape back to batch-first (B, T, H) — no transpose needed.
    return out_flat.reshape(B, T, H)


def _gru_reference(x_btI, w_ih, w_hh, b_ih, b_hh, hidden_size):
    """Pure-JAX f32 reference (lax.scan) mirroring torch.nn.GRU semantics."""
    B, T, I = x_btI.shape
    H = hidden_size
    x_tbI = jnp.transpose(x_btI, (1, 0, 2))

    def step(h, x_t):
        gi = x_t @ w_ih.T + b_ih          # (B, 3H)
        gh = h @ w_hh.T + b_hh            # (B, 3H)
        i_r, i_z, i_n = gi[:, :H], gi[:, H:2 * H], gi[:, 2 * H:]
        h_r, h_z, h_n = gh[:, :H], gh[:, H:2 * H], gh[:, 2 * H:]
        r = jax.nn.sigmoid(i_r + h_r)
        z = jax.nn.sigmoid(i_z + h_z)
        n = jnp.tanh(i_n + r * h_n)
        h_new = (1.0 - z) * n + z * h
        return h_new, h_new

    h0 = jnp.zeros((B, H), jnp.float32)
    _, out_tbH = jax.lax.scan(step, h0, x_tbI)
    return jnp.transpose(out_tbH, (1, 0, 2))


if __name__ == "__main__":
    # Small shapes consistent with the module: (batch, seq, input_size).
    B, T, INPUT_SIZE, HIDDEN_SIZE = 2, 8, 16, 32

    key = jax.random.PRNGKey(0)
    k_x, k_wi, k_wh, k_bi, k_bh = jax.random.split(key, 5)

    # Parameter init mimicking PyTorch GRU's U(-1/sqrt(H), 1/sqrt(H)).
    bound = 1.0 / jnp.sqrt(jnp.float32(HIDDEN_SIZE))
    w_ih = jax.random.uniform(k_wi, (3 * HIDDEN_SIZE, INPUT_SIZE), jnp.float32, -bound, bound)
    w_hh = jax.random.uniform(k_wh, (3 * HIDDEN_SIZE, HIDDEN_SIZE), jnp.float32, -bound, bound)
    b_ih = jax.random.uniform(k_bi, (3 * HIDDEN_SIZE,), jnp.float32, -bound, bound)
    b_hh = jax.random.uniform(k_bh, (3 * HIDDEN_SIZE,), jnp.float32, -bound, bound)

    x = jax.random.normal(k_x, (B, T, INPUT_SIZE), jnp.float32)

    out = gru_encoder_forward(x, w_ih, w_hh, b_ih, b_hh, hidden_size=HIDDEN_SIZE)
    out = jax.block_until_ready(out)

    # Sanity check against the pure-JAX f32 reference. Only the one-shot input
    # projection uses bf16 operands (f32 accumulation); hidden path is f32.
    ref = _gru_reference(x, w_ih, w_hh, b_ih, b_hh, HIDDEN_SIZE)
    assert out.shape == (B, T, HIDDEN_SIZE)
    assert jnp.allclose(out, ref, atol=3e-2, rtol=3e-2), "Pallas GRU mismatch vs reference"

    print("KERNEL_OK")
</pallas_src>

<mosaic_0001>
module attributes {stable_mosaic.version = 11 : i64} {
  func.func @_gru_seq_kernel(%arg0: i32, %arg1: memref<16x16xf32, #tpu.memory_space<vmem>>, %arg2: memref<16x384xbf16, #tpu.memory_space<vmem>>, %arg3: memref<128x384xf32, #tpu.memory_space<vmem>>, %arg4: memref<1x384xf32, #tpu.memory_space<vmem>>, %arg5: memref<1x384xf32, #tpu.memory_space<vmem>>, %arg6: memref<2x256xf32, #tpu.memory_space<vmem>>) attributes {dimension_semantics = [#tpu.dimension_semantics<arbitrary>], iteration_bounds = array<i64: 1>, scalar_prefetch = 0 : i64, scratch_operands = 0 : i64, tpu.core_type = #tpu.core_type<tc>, window_params = [{pipeline_mode = #tpu.pipeline_mode<synchronous>, transform_indices = @transform_0, window_bounds = array<i64: 16, 16>}, {pipeline_mode = #tpu.pipeline_mode<synchronous>, transform_indices = @transform_1, window_bounds = array<i64: 16, 384>}, {pipeline_mode = #tpu.pipeline_mode<synchronous>, transform_indices = @transform_2, window_bounds = array<i64: 128, 384>}, {pipeline_mode = #tpu.pipeline_mode<synchronous>, transform_indices = @transform_3, window_bounds = array<i64: 1, 384>}, {pipeline_mode = #tpu.pipeline_mode<synchronous>, transform_indices = @transform_4, window_bounds = array<i64: 1, 384>}, {pipeline_mode = #tpu.pipeline_mode<synchronous>, transform_indices = @transform_5, window_bounds = array<i64: 2, 256>}]} {
    %c0 = arith.constant 0 : index
    %c0_0 = arith.constant 0 : index
    %0 = vector.load %arg1[%c0, %c0_0] : memref<16x16xf32, #tpu.memory_space<vmem>>, vector<16x16xf32>
    %1 = arith.truncf %0 : vector<16x16xf32> to vector<16x16xbf16>
    %c0_1 = arith.constant 0 : index
    %c0_2 = arith.constant 0 : index
    %2 = vector.load %arg2[%c0_1, %c0_2] : memref<16x384xbf16, #tpu.memory_space<vmem>>, vector<16x384xbf16>
    %cst = arith.constant dense<0.000000e+00> : vector<16x384xf32>
    %3 = tpu.matmul %1, %2, %cst {dimension_numbers = #tpu.dot_dimension_numbers<[1], [0], [0], [1], [0, 0, 1, 1], [], []>} : vector<16x16xbf16>, vector<16x384xbf16>, vector<16x384xf32> -> vector<16x384xf32>
    %c0_3 = arith.constant 0 : index
    %c0_4 = arith.constant 0 : index
    %4 = vector.load %arg4[%c0_3, %c0_4] : memref<1x384xf32, #tpu.memory_space<vmem>>, vector<1x384xf32>
    %5 = vector.broadcast %4 : vector<1x384xf32> to vector<16x384xf32>
    %6 = arith.addf %3, %5 : vector<16x384xf32>
    %7 = vector.shape_cast %6 : vector<16x384xf32> to vector<2x8x384xf32>
    %c0_5 = arith.constant 0 : index
    %c0_6 = arith.constant 0 : index
    %8 = vector.load %arg3[%c0_5, %c0_6] : memref<128x384xf32, #tpu.memory_space<vmem>>, vector<128x384xf32>
    %c0_7 = arith.constant 0 : index
    %c0_8 = arith.constant 0 : index
    %9 = vector.load %arg5[%c0_7, %c0_8] : memref<1x384xf32, #tpu.memory_space<vmem>>, vector<1x384xf32>
    %10 = vector.shape_cast %9 : vector<1x384xf32> to vector<1x384xf32>
    %11 = vector.broadcast %10 : vector<1x384xf32> to vector<2x384xf32>
    %12 = vector.extract_strided_slice %7 {offsets = [0, 0, 0], sizes = [2, 1, 384], strides = [1, 1, 1]} : vector<2x8x384xf32> to vector<2x1x384xf32>
    %13 = vector.shape_cast %12 : vector<2x1x384xf32> to vector<2x384xf32>
    %14 = vector.extract_strided_slice %7 {offsets = [0, 1, 0], sizes = [2, 1, 384], strides = [1, 1, 1]} : vector<2x8x384xf32> to vector<2x1x384xf32>
    %15 = vector.shape_cast %14 : vector<2x1x384xf32> to vector<2x384xf32>
    %16 = vector.extract_strided_slice %7 {offsets = [0, 2, 0], sizes = [2, 1, 384], strides = [1, 1, 1]} : vector<2x8x384xf32> to vector<2x1x384xf32>
    %17 = vector.shape_cast %16 : vector<2x1x384xf32> to vector<2x384xf32>
    %18 = vector.extract_strided_slice %7 {offsets = [0, 3, 0], sizes = [2, 1, 384], strides = [1, 1, 1]} : vector<2x8x384xf32> to vector<2x1x384xf32>
    %19 = vector.shape_cast %18 : vector<2x1x384xf32> to vector<2x384xf32>
    %20 = vector.extract_strided_slice %7 {offsets = [0, 4, 0], sizes = [2, 1, 384], strides = [1, 1, 1]} : vector<2x8x384xf32> to vector<2x1x384xf32>
    %21 = vector.shape_cast %20 : vector<2x1x384xf32> to vector<2x384xf32>
    %22 = vector.extract_strided_slice %7 {offsets = [0, 5, 0], sizes = [2, 1, 384], strides = [1, 1, 1]} : vector<2x8x384xf32> to vector<2x1x384xf32>
    %23 = vector.shape_cast %22 : vector<2x1x384xf32> to vector<2x384xf32>
    %24 = vector.extract_strided_slice %7 {offsets = [0, 6, 0], sizes = [2, 1, 384], strides = [1, 1, 1]} : vector<2x8x384xf32> to vector<2x1x384xf32>
    %25 = vector.shape_cast %24 : vector<2x1x384xf32> to vector<2x384xf32>
    %26 = vector.extract_strided_slice %7 {offsets = [0, 7, 0], sizes = [2, 1, 384], strides = [1, 1, 1]} : vector<2x8x384xf32> to vector<2x1x384xf32>
    %27 = vector.shape_cast %26 : vector<2x1x384xf32> to vector<2x384xf32>
    %cst_9 = arith.constant 0.000000e+00 : f32
    %28 = vector.broadcast %cst_9 : f32 to vector<2x128xf32>
    %cst_10 = arith.constant dense<0.000000e+00> : vector<2x384xf32>
    %29 = tpu.matmul %28, %8, %cst_10 {dimension_numbers = #tpu.dot_dimension_numbers<[1], [0], [0], [1], [0, 0, 1, 1], [], []>} : vector<2x128xf32>, vector<128x384xf32>, vector<2x384xf32> -> vector<2x384xf32>
    %30 = arith.addf %29, %11 : vector<2x384xf32>
    %31 = vector.extract_strided_slice %13 {offsets = [0, 0], sizes = [2, 128], strides = [1, 1]} : vector<2x384xf32> to vector<2x128xf32>
    %32 = vector.extract_strided_slice %30 {offsets = [0, 0], sizes = [2, 128], strides = [1, 1]} : vector<2x384xf32> to vector<2x128xf32>
    %33 = arith.addf %31, %32 : vector<2x128xf32>
    %34 = arith.negf %33 : vector<2x128xf32>
    %35 = math.exp %34 : vector<2x128xf32>
    %cst_11 = arith.constant 1.000000e+00 : f32
    %36 = vector.broadcast %cst_11 : f32 to vector<2x128xf32>
    %37 = arith.addf %36, %35 : vector<2x128xf32>
    %38 = arith.divf %36, %37 : vector<2x128xf32>
    %39 = vector.extract_strided_slice %13 {offsets = [0, 128], sizes = [2, 128], strides = [1, 1]} : vector<2x384xf32> to vector<2x128xf32>
    %40 = vector.extract_strided_slice %30 {offsets = [0, 128], sizes = [2, 128], strides = [1, 1]} : vector<2x384xf32> to vector<2x128xf32>
    %41 = arith.addf %39, %40 : vector<2x128xf32>
    %42 = arith.negf %41 : vector<2x128xf32>
    %43 = math.exp %42 : vector<2x128xf32>
    %cst_12 = arith.constant 1.000000e+00 : f32
    %44 = vector.broadcast %cst_12 : f32 to vector<2x128xf32>
    %45 = arith.addf %44, %43 : vector<2x128xf32>
    %46 = arith.divf %44, %45 : vector<2x128xf32>
    %47 = vector.extract_strided_slice %13 {offsets = [0, 256], sizes = [2, 128], strides = [1, 1]} : vector<2x384xf32> to vector<2x128xf32>
    %48 = vector.extract_strided_slice %30 {offsets = [0, 256], sizes = [2, 128], strides = [1, 1]} : vector<2x384xf32> to vector<2x128xf32>
    %49 = arith.mulf %38, %48 : vector<2x128xf32>
    %50 = arith.addf %47, %49 : vector<2x128xf32>
    %51 = math.tanh %50 : vector<2x128xf32>
    %52 = arith.subf %28, %51 : vector<2x128xf32>
    %53 = arith.mulf %46, %52 : vector<2x128xf32>
    %54 = arith.addf %51, %53 : vector<2x128xf32>
    %55 = vector.extract_strided_slice %54 {offsets = [0, 0], sizes = [2, 32], strides = [1, 1]} : vector<2x128xf32> to vector<2x32xf32>
    %cst_13 = arith.constant dense<0.000000e+00> : vector<2x384xf32>
    %56 = tpu.matmul %54, %8, %cst_13 {dimension_numbers = #tpu.dot_dimension_numbers<[1], [0], [0], [1], [0, 0, 1, 1], [], []>} : vector<2x128xf32>, vector<128x384xf32>, vector<2x384xf32> -> vector<2x384xf32>
    %57 = arith.addf %56, %11 : vector<2x384xf32>
    %58 = vector.extract_strided_slice %15 {offsets = [0, 0], sizes = [2, 128], strides = [1, 1]} : vector<2x384xf32> to vector<2x128xf32>
    %59 = vector.extract_strided_slice %57 {offsets = [0, 0], sizes = [2, 128], strides = [1, 1]} : vector<2x384xf32> to vector<2x128xf32>
    %60 = arith.addf %58, %59 : vector<2x128xf32>
    %61 = arith.negf %60 : vector<2x128xf32>
    %62 = math.exp %61 : vector<2x128xf32>
    %cst_14 = arith.constant 1.000000e+00 : f32
    %63 = vector.broadcast %cst_14 : f32 to vector<2x128xf32>
    %64 = arith.addf %63, %62 : vector<2x128xf32>
    %65 = arith.divf %63, %64 : vector<2x128xf32>
    %66 = vector.extract_strided_slice %15 {offsets = [0, 128], sizes = [2, 128], strides = [1, 1]} : vector<2x384xf32> to vector<2x128xf32>
    %67 = vector.extract_strided_slice %57 {offsets = [0, 128], sizes = [2, 128], strides = [1, 1]} : vector<2x384xf32> to vector<2x128xf32>
    %68 = arith.addf %66, %67 : vector<2x128xf32>
    %69 = arith.negf %68 : vector<2x128xf32>
    %70 = math.exp %69 : vector<2x128xf32>
    %cst_15 = arith.constant 1.000000e+00 : f32
    %71 = vector.broadcast %cst_15 : f32 to vector<2x128xf32>
    %72 = arith.addf %71, %70 : vector<2x128xf32>
    %73 = arith.divf %71, %72 : vector<2x128xf32>
    %74 = vector.extract_strided_slice %15 {offsets = [0, 256], sizes = [2, 128], strides = [1, 1]} : vector<2x384xf32> to vector<2x128xf32>
    %75 = vector.extract_strided_slice %57 {offsets = [0, 256], sizes = [2, 128], strides = [1, 1]} : vector<2x384xf32> to vector<2x128xf32>
    %76 = arith.mulf %65, %75 : vector<2x128xf32>
    %77 = arith.addf %74, %76 : vector<2x128xf32>
    %78 = math.tanh %77 : vector<2x128xf32>
    %79 = arith.subf %54, %78 : vector<2x128xf32>
    %80 = arith.mulf %73, %79 : vector<2x128xf32>
    %81 = arith.addf %78, %80 : vector<2x128xf32>
    %82 = vector.extract_strided_slice %81 {offsets = [0, 0], sizes = [2, 32], strides = [1, 1]} : vector<2x128xf32> to vector<2x32xf32>
    %cst_16 = arith.constant dense<0.000000e+00> : vector<2x384xf32>
    %83 = tpu.matmul %81, %8, %cst_16 {dimension_numbers = #tpu.dot_dimension_numbers<[1], [0], [0], [1], [0, 0, 1, 1], [], []>} : vector<2x128xf32>, vector<128x384xf32>, vector<2x384xf32> -> vector<2x384xf32>
    %84 = arith.addf %83, %11 : vector<2x384xf32>
    %85 = vector.extract_strided_slice %17 {offsets = [0, 0], sizes = [2, 128], strides = [1, 1]} : vector<2x384xf32> to vector<2x128xf32>
    %86 = vector.extract_strided_slice %84 {offsets = [0, 0], sizes = [2, 128], strides = [1, 1]} : vector<2x384xf32> to vector<2x128xf32>
    %87 = arith.addf %85, %86 : vector<2x128xf32>
    %88 = arith.negf %87 : vector<2x128xf32>
    %89 = math.exp %88 : vector<2x128xf32>
    %cst_17 = arith.constant 1.000000e+00 : f32
    %90 = vector.broadcast %cst_17 : f32 to vector<2x128xf32>
    %91 = arith.addf %90, %89 : vector<2x128xf32>
    %92 = arith.divf %90, %91 : vector<2x128xf32>
    %93 = vector.extract_strided_slice %17 {offsets = [0, 128], sizes = [2, 128], strides = [1, 1]} : vector<2x384xf32> to vector<2x128xf32>
    %94 = vector.extract_strided_slice %84 {offsets = [0, 128], sizes = [2, 128], strides = [1, 1]} : vector<2x384xf32> to vector<2x128xf32>
    %95 = arith.addf %93, %94 : vector<2x128xf32>
    %96 = arith.negf %95 : vector<2x128xf32>
    %97 = math.exp %96 : vector<2x128xf32>
    %cst_18 = arith.constant 1.000000e+00 : f32
    %98 = vector.broadcast %cst_18 : f32 to vector<2x128xf32>
    %99 = arith.addf %98, %97 : vector<2x128xf32>
    %100 = arith.divf %98, %99 : vector<2x128xf32>
    %101 = vector.extract_strided_slice %17 {offsets = [0, 256], sizes = [2, 128], strides = [1, 1]} : vector<2x384xf32> to vector<2x128xf32>
    %102 = vector.extract_strided_slice %84 {offsets = [0, 256], sizes = [2, 128], strides = [1, 1]} : vector<2x384xf32> to vector<2x128xf32>
    %103 = arith.mulf %92, %102 : vector<2x128xf32>
    %104 = arith.addf %101, %103 : vector<2x128xf32>
    %105 = math.tanh %104 : vector<2x128xf32>
    %106 = arith.subf %81, %105 : vector<2x128xf32>
    %107 = arith.mulf %100, %106 : vector<2x128xf32>
    %108 = arith.addf %105, %107 : vector<2x128xf32>
    %109 = vector.extract_strided_slice %108 {offsets = [0, 0], sizes = [2, 32], strides = [1, 1]} : vector<2x128xf32> to vector<2x32xf32>
    %cst_19 = arith.constant dense<0.000000e+00> : vector<2x384xf32>
    %110 = tpu.matmul %108, %8, %cst_19 {dimension_numbers = #tpu.dot_dimension_numbers<[1], [0], [0], [1], [0, 0, 1, 1], [], []>} : vector<2x128xf32>, vector<128x384xf32>, vector<2x384xf32> -> vector<2x384xf32>
    %111 = arith.addf %110, %11 : vector<2x384xf32>
    %112 = vector.extract_strided_slice %19 {offsets = [0, 0], sizes = [2, 128], strides = [1, 1]} : vector<2x384xf32> to vector<2x128xf32>
    %113 = vector.extract_strided_slice %111 {offsets = [0, 0], sizes = [2, 128], strides = [1, 1]} : vector<2x384xf32> to vector<2x128xf32>
    %114 = arith.addf %112, %113 : vector<2x128xf32>
    %115 = arith.negf %114 : vector<2x128xf32>
    %116 = math.exp %115 : vector<2x128xf32>
    %cst_20 = arith.constant 1.000000e+00 : f32
    %117 = vector.broadcast %cst_20 : f32 to vector<2x128xf32>
    %118 = arith.addf %117, %116 : vector<2x128xf32>
    %119 = arith.divf %117, %118 : vector<2x128xf32>
    %120 = vector.extract_strided_slice %19 {offsets = [0, 128], sizes = [2, 128], strides = [1, 1]} : vector<2x384xf32> to vector<2x128xf32>
    %121 = vector.extract_strided_slice %111 {offsets = [0, 128], sizes = [2, 128], strides = [1, 1]} : vector<2x384xf32> to vector<2x128xf32>
    %122 = arith.addf %120, %121 : vector<2x128xf32>
    %123 = arith.negf %122 : vector<2x128xf32>
    %124 = math.exp %123 : vector<2x128xf32>
    %cst_21 = arith.constant 1.000000e+00 : f32
    %125 = vector.broadcast %cst_21 : f32 to vector<2x128xf32>
    %126 = arith.addf %125, %124 : vector<2x128xf32>
    %127 = arith.divf %125, %126 : vector<2x128xf32>
    %128 = vector.extract_strided_slice %19 {offsets = [0, 256], sizes = [2, 128], strides = [1, 1]} : vector<2x384xf32> to vector<2x128xf32>
    %129 = vector.extract_strided_slice %111 {offsets = [0, 256], sizes = [2, 128], strides = [1, 1]} : vector<2x384xf32> to vector<2x128xf32>
    %130 = arith.mulf %119, %129 : vector<2x128xf32>
    %131 = arith.addf %128, %130 : vector<2x128xf32>
    %132 = math.tanh %131 : vector<2x128xf32>
    %133 = arith.subf %108, %132 : vector<2x128xf32>
    %134 = arith.mulf %127, %133 : vector<2x128xf32>
    %135 = arith.addf %132, %134 : vector<2x128xf32>
    %136 = vector.extract_strided_slice %135 {offsets = [0, 0], sizes = [2, 32], strides = [1, 1]} : vector<2x128xf32> to vector<2x32xf32>
    %cst_22 = arith.constant dense<0.000000e+00> : vector<2x384xf32>
    %137 = tpu.matmul %135, %8, %cst_22 {dimension_numbers = #tpu.dot_dimension_numbers<[1], [0], [0], [1], [0, 0, 1, 1], [], []>} : vector<2x128xf32>, vector<128x384xf32>, vector<2x384xf32> -> vector<2x384xf32>
    %138 = arith.addf %137, %11 : vector<2x384xf32>
    %139 = vector.extract_strided_slice %21 {offsets = [0, 0], sizes = [2, 128], strides = [1, 1]} : vector<2x384xf32> to vector<2x128xf32>
    %140 = vector.extract_strided_slice %138 {offsets = [0, 0], sizes = [2, 128], strides = [1, 1]} : vector<2x384xf32> to vector<2x128xf32>
    %141 = arith.addf %139, %140 : vector<2x128xf32>
    %142 = arith.negf %141 : vector<2x128xf32>
    %143 = math.exp %142 : vector<2x128xf32>
    %cst_23 = arith.constant 1.000000e+00 : f32
    %144 = vector.broadcast %cst_23 : f32 to vector<2x128xf32>
    %145 = arith.addf %144, %143 : vector<2x128xf32>
    %146 = arith.divf %144, %145 : vector<2x128xf32>
    %147 = vector.extract_strided_slice %21 {offsets = [0, 128], sizes = [2, 128], strides = [1, 1]} : vector<2x384xf32> to vector<2x128xf32>
    %148 = vector.extract_strided_slice %138 {offsets = [0, 128], sizes = [2, 128], strides = [1, 1]} : vector<2x384xf32> to vector<2x128xf32>
    %149 = arith.addf %147, %148 : vector<2x128xf32>
    %150 = arith.negf %149 : vector<2x128xf32>
    %151 = math.exp %150 : vector<2x128xf32>
    %cst_24 = arith.constant 1.000000e+00 : f32
    %152 = vector.broadcast %cst_24 : f32 to vector<2x128xf32>
    %153 = arith.addf %152, %151 : vector<2x128xf32>
    %154 = arith.divf %152, %153 : vector<2x128xf32>
    %155 = vector.extract_strided_slice %21 {offsets = [0, 256], sizes = [2, 128], strides = [1, 1]} : vector<2x384xf32> to vector<2x128xf32>
    %156 = vector.extract_strided_slice %138 {offsets = [0, 256], sizes = [2, 128], strides = [1, 1]} : vector<2x384xf32> to vector<2x128xf32>
    %157 = arith.mulf %146, %156 : vector<2x128xf32>
    %158 = arith.addf %155, %157 : vector<2x128xf32>
    %159 = math.tanh %158 : vector<2x128xf32>
    %160 = arith.subf %135, %159 : vector<2x128xf32>
    %161 = arith.mulf %154, %160 : vector<2x128xf32>
    %162 = arith.addf %159, %161 : vector<2x128xf32>
    %163 = vector.extract_strided_slice %162 {offsets = [0, 0], sizes = [2, 32], strides = [1, 1]} : vector<2x128xf32> to vector<2x32xf32>
    %cst_25 = arith.constant dense<0.000000e+00> : vector<2x384xf32>
    %164 = tpu.matmul %162, %8, %cst_25 {dimension_numbers = #tpu.dot_dimension_numbers<[1], [0], [0], [1], [0, 0, 1, 1], [], []>} : vector<2x128xf32>, vector<128x384xf32>, vector<2x384xf32> -> vector<2x384xf32>
    %165 = arith.addf %164, %11 : vector<2x384xf32>
    %166 = vector.extract_strided_slice %23 {offsets = [0, 0], sizes = [2, 128], strides = [1, 1]} : vector<2x384xf32> to vector<2x128xf32>
    %167 = vector.extract_strided_slice %165 {offsets = [0, 0], sizes = [2, 128], strides = [1, 1]} : vector<2x384xf32> to vector<2x128xf32>
    %168 = arith.addf %166, %167 : vector<2x128xf32>
    %169 = arith.negf %168 : vector<2x128xf32>
    %170 = math.exp %169 : vector<2x128xf32>
    %cst_26 = arith.constant 1.000000e+00 : f32
    %171 = vector.broadcast %cst_26 : f32 to vector<2x128xf32>
    %172 = arith.addf %171, %170 : vector<2x128xf32>
    %173 = arith.divf %171, %172 : vector<2x128xf32>
    %174 = vector.extract_strided_slice %23 {offsets = [0, 128], sizes = [2, 128], strides = [1, 1]} : vector<2x384xf32> to vector<2x128xf32>
    %175 = vector.extract_strided_slice %165 {offsets = [0, 128], sizes = [2, 128], strides = [1, 1]} : vector<2x384xf32> to vector<2x128xf32>
    %176 = arith.addf %174, %175 : vector<2x128xf32>
    %177 = arith.negf %176 : vector<2x128xf32>
    %178 = math.exp %177 : vector<2x128xf32>
    %cst_27 = arith.constant 1.000000e+00 : f32
    %179 = vector.broadcast %cst_27 : f32 to vector<2x128xf32>
    %180 = arith.addf %179, %178 : vector<2x128xf32>
    %181 = arith.divf %179, %180 : vector<2x128xf32>
    %182 = vector.extract_strided_slice %23 {offsets = [0, 256], sizes = [2, 128], strides = [1, 1]} : vector<2x384xf32> to vector<2x128xf32>
    %183 = vector.extract_strided_slice %165 {offsets = [0, 256], sizes = [2, 128], strides = [1, 1]} : vector<2x384xf32> to vector<2x128xf32>
    %184 = arith.mulf %173, %183 : vector<2x128xf32>
    %185 = arith.addf %182, %184 : vector<2x128xf32>
    %186 = math.tanh %185 : vector<2x128xf32>
    %187 = arith.subf %162, %186 : vector<2x128xf32>
    %188 = arith.mulf %181, %187 : vector<2x128xf32>
    %189 = arith.addf %186, %188 : vector<2x128xf32>
    %190 = vector.extract_strided_slice %189 {offsets = [0, 0], sizes = [2, 32], strides = [1, 1]} : vector<2x128xf32> to vector<2x32xf32>
    %cst_28 = arith.constant dense<0.000000e+00> : vector<2x384xf32>
    %191 = tpu.matmul %189, %8, %cst_28 {dimension_numbers = #tpu.dot_dimension_numbers<[1], [0], [0], [1], [0, 0, 1, 1], [], []>} : vector<2x128xf32>, vector<128x384xf32>, vector<2x384xf32> -> vector<2x384xf32>
    %192 = arith.addf %191, %11 : vector<2x384xf32>
    %193 = vector.extract_strided_slice %25 {offsets = [0, 0], sizes = [2, 128], strides = [1, 1]} : vector<2x384xf32> to vector<2x128xf32>
    %194 = vector.extract_strided_slice %192 {offsets = [0, 0], sizes = [2, 128], strides = [1, 1]} : vector<2x384xf32> to vector<2x128xf32>
    %195 = arith.addf %193, %194 : vector<2x128xf32>
    %196 = arith.negf %195 : vector<2x128xf32>
    %197 = math.exp %196 : vector<2x128xf32>
    %cst_29 = arith.constant 1.000000e+00 : f32
    %198 = vector.broadcast %cst_29 : f32 to vector<2x128xf32>
    %199 = arith.addf %198, %197 : vector<2x128xf32>
    %200 = arith.divf %198, %199 : vector<2x128xf32>
    %201 = vector.extract_strided_slice %25 {offsets = [0, 128], sizes = [2, 128], strides = [1, 1]} : vector<2x384xf32> to vector<2x128xf32>
    %202 = vector.extract_strided_slice %192 {offsets = [0, 128], sizes = [2, 128], strides = [1, 1]} : vector<2x384xf32> to vector<2x128xf32>
    %203 = arith.addf %201, %202 : vector<2x128xf32>
    %204 = arith.negf %203 : vector<2x128xf32>
    %205 = math.exp %204 : vector<2x128xf32>
    %cst_30 = arith.constant 1.000000e+00 : f32
    %206 = vector.broadcast %cst_30 : f32 to vector<2x128xf32>
    %207 = arith.addf %206, %205 : vector<2x128xf32>
    %208 = arith.divf %206, %207 : vector<2x128xf32>
    %209 = vector.extract_strided_slice %25 {offsets = [0, 256], sizes = [2, 128], strides = [1, 1]} : vector<2x384xf32> to vector<2x128xf32>
    %210 = vector.extract_strided_slice %192 {offsets = [0, 256], sizes = [2, 128], strides = [1, 1]} : vector<2x384xf32> to vector<2x128xf32>
    %211 = arith.mulf %200, %210 : vector<2x128xf32>
    %212 = arith.addf %209, %211 : vector<2x128xf32>
    %213 = math.tanh %212 : vector<2x128xf32>
    %214 = arith.subf %189, %213 : vector<2x128xf32>
    %215 = arith.mulf %208, %214 : vector<2x128xf32>
    %216 = arith.addf %213, %215 : vector<2x128xf32>
    %217 = vector.extract_strided_slice %216 {offsets = [0, 0], sizes = [2, 32], strides = [1, 1]} : vector<2x128xf32> to vector<2x32xf32>
    %cst_31 = arith.constant dense<0.000000e+00> : vector<2x384xf32>
    %218 = tpu.matmul %216, %8, %cst_31 {dimension_numbers = #tpu.dot_dimension_numbers<[1], [0], [0], [1], [0, 0, 1, 1], [], []>} : vector<2x128xf32>, vector<128x384xf32>, vector<2x384xf32> -> vector<2x384xf32>
    %219 = arith.addf %218, %11 : vector<2x384xf32>
    %220 = vector.extract_strided_slice %27 {offsets = [0, 0], sizes = [2, 128], strides = [1, 1]} : vector<2x384xf32> to vector<2x128xf32>
    %221 = vector.extract_strided_slice %219 {offsets = [0, 0], sizes = [2, 128], strides = [1, 1]} : vector<2x384xf32> to vector<2x128xf32>
    %222 = arith.addf %220, %221 : vector<2x128xf32>
    %223 = arith.negf %222 : vector<2x128xf32>
    %224 = math.exp %223 : vector<2x128xf32>
    %cst_32 = arith.constant 1.000000e+00 : f32
    %225 = vector.broadcast %cst_32 : f32 to vector<2x128xf32>
    %226 = arith.addf %225, %224 : vector<2x128xf32>
    %227 = arith.divf %225, %226 : vector<2x128xf32>
    %228 = vector.extract_strided_slice %27 {offsets = [0, 128], sizes = [2, 128], strides = [1, 1]} : vector<2x384xf32> to vector<2x128xf32>
    %229 = vector.extract_strided_slice %219 {offsets = [0, 128], sizes = [2, 128], strides = [1, 1]} : vector<2x384xf32> to vector<2x128xf32>
    %230 = arith.addf %228, %229 : vector<2x128xf32>
    %231 = arith.negf %230 : vector<2x128xf32>
    %232 = math.exp %231 : vector<2x128xf32>
    %cst_33 = arith.constant 1.000000e+00 : f32
    %233 = vector.broadcast %cst_33 : f32 to vector<2x128xf32>
    %234 = arith.addf %233, %232 : vector<2x128xf32>
    %235 = arith.divf %233, %234 : vector<2x128xf32>
    %236 = vector.extract_strided_slice %27 {offsets = [0, 256], sizes = [2, 128], strides = [1, 1]} : vector<2x384xf32> to vector<2x128xf32>
    %237 = vector.extract_strided_slice %219 {offsets = [0, 256], sizes = [2, 128], strides = [1, 1]} : vector<2x384xf32> to vector<2x128xf32>
    %238 = arith.mulf %227, %237 : vector<2x128xf32>
    %239 = arith.addf %236, %238 : vector<2x128xf32>
    %240 = math.tanh %239 : vector<2x128xf32>
    %241 = arith.subf %216, %240 : vector<2x128xf32>
    %242 = arith.mulf %235, %241 : vector<2x128xf32>
    %243 = arith.addf %240, %242 : vector<2x128xf32>
    %244 = vector.extract_strided_slice %243 {offsets = [0, 0], sizes = [2, 32], strides = [1, 1]} : vector<2x128xf32> to vector<2x32xf32>
    %245 = tpu.concatenate %55, %82, %109, %136, %163, %190, %217, %244 in 1 : vector<2x32xf32>, vector<2x32xf32>, vector<2x32xf32>, vector<2x32xf32>, vector<2x32xf32>, vector<2x32xf32>, vector<2x32xf32>, vector<2x32xf32> -> vector<2x256xf32>
    %c0_34 = arith.constant 0 : index
    %c0_35 = arith.constant 0 : index
    %246 = vector.load %arg6[%c0_34, %c0_35] : memref<2x256xf32, #tpu.memory_space<vmem>>, vector<2x256xf32>
    tpu.vector_store %arg6[%c0_34, %c0_35], %245 {strides = array<i32>} : memref<2x256xf32, #tpu.memory_space<vmem>>, vector<2x256xf32>,
    return
  }
  func.func @transform_0(%arg0: i32) -> (i32, i32) {
    %c0_i32 = arith.constant 0 : i32
    %c0_i32_0 = arith.constant 0 : i32
    %c0_i32_1 = arith.constant 0 : i32
    return %c0_i32, %c0_i32_0 : i32, i32
  }
  func.func @transform_1(%arg0: i32) -> (i32, i32) {
    %c0_i32 = arith.constant 0 : i32
    %c0_i32_0 = arith.constant 0 : i32
    %c0_i32_1 = arith.constant 0 : i32
    return %c0_i32, %c0_i32_0 : i32, i32
  }
  func.func @transform_2(%arg0: i32) -> (i32, i32) {
    %c0_i32 = arith.constant 0 : i32
    %c0_i32_0 = arith.constant 0 : i32
    %c0_i32_1 = arith.constant 0 : i32
    return %c0_i32, %c0_i32_0 : i32, i32
  }
  func.func @transform_3(%arg0: i32) -> (i32, i32) {
    %c0_i32 = arith.constant 0 : i32
    %c0_i32_0 = arith.constant 0 : i32
    %c0_i32_1 = arith.constant 0 : i32
    return %c0_i32, %c0_i32_0 : i32, i32
  }
  func.func @transform_4(%arg0: i32) -> (i32, i32) {
    %c0_i32 = arith.constant 0 : i32
    %c0_i32_0 = arith.constant 0 : i32
    %c0_i32_1 = arith.constant 0 : i32
    return %c0_i32, %c0_i32_0 : i32, i32
  }
  func.func @transform_5(%arg0: i32) -> (i32, i32) {
    %c0_i32 = arith.constant 0 : i32
    %c0_i32_0 = arith.constant 0 : i32
    %c0_i32_1 = arith.constant 0 : i32
    return %c0_i32, %c0_i32_0 : i32, i32
  }
}

</mosaic_0001>

<llo_original>
// kernel: gru_encoder_forward.1
$region0: #{gru_encoder_forward.1}
  #allocation0 [shape = 'u32[]', space=smem, size = 0x4, offset = 0x4, fixed_abs, tag = 'smem constant byte address 0x4 - core index']
  #allocation1 [shape = 'u32[72,128]{1,0:T(1,128)}', space=vmem, size = 0x9000, scoped, tag = 'internal scratch']
  %s0 = inlined_call_operand.vmem [shape: f32[16,16], index: 0, kind: input, shape index: {}]
  %s1 = inlined_call_operand.vmem [shape: bf16[16,384], index: 1, kind: input, shape index: {}]
  %s2 = inlined_call_operand.vmem [shape: f32[128,384], index: 2, kind: input, shape index: {}]
  %s3 = inlined_call_operand.vmem [shape: f32[1,384], index: 3, kind: input, shape index: {}]
  %s4 = inlined_call_operand.vmem [shape: f32[1,384], index: 4, kind: input, shape index: {}]
  %s5 = inlined_call_operand.vmem [shape: f32[2,256], index: 5, kind: output, shape index: {}]
  %s6 = sld [smem:[#allocation0]]
  $region30: #{gru_encoder_forward.1} parent=0
    _
  %s8 = ssub.s32 1, %s6
  %s9 = scalar_select 0, %s8, %s6
  // Predicated region
  $region2: #{gru_encoder_forward.1} parent=0 // pred_check
    _
  $region3: #{gru_encoder_forward.1} parent=0 // pred_check_branch
    %11 = sbr.rel (0) target = $region5
  $region4: #{gru_encoder_forward.1} parent=0 // pred_region
    _
  $region5: #{gru_encoder_forward.1} parent=0 // pred_fallthru
    _
  // Predicated region
  $region6: #{gru_encoder_forward.1} parent=0 // pred_check
    _
  $region7: #{gru_encoder_forward.1} parent=0 // pred_check_branch
    %13 = sbr.rel (0) target = $region9
  $region8: #{gru_encoder_forward.1} parent=0 // pred_region
    _
  $region9: #{gru_encoder_forward.1} parent=0 // pred_fallthru
    _
  // Predicated region
  $region10: #{gru_encoder_forward.1} parent=0 // pred_check
    _
  $region11: #{gru_encoder_forward.1} parent=0 // pred_check_branch
    %15 = sbr.rel (0) target = $region13
  $region12: #{gru_encoder_forward.1} parent=0 // pred_region
    _
  $region13: #{gru_encoder_forward.1} parent=0 // pred_fallthru
    _
  // Predicated region
  $region14: #{gru_encoder_forward.1} parent=0 // pred_check
    _
  $region15: #{gru_encoder_forward.1} parent=0 // pred_check_branch
    %17 = sbr.rel (0) target = $region17
  $region16: #{gru_encoder_forward.1} parent=0 // pred_region
    _
  $region17: #{gru_encoder_forward.1} parent=0 // pred_fallthru
    _
  // Predicated region
  $region18: #{gru_encoder_forward.1} parent=0 // pred_check
    _
  $region19: #{gru_encoder_forward.1} parent=0 // pred_check_branch
    %19 = sbr.rel (0) target = $region21
  $region20: #{gru_encoder_forward.1} parent=0 // pred_region
    _
  $region21: #{gru_encoder_forward.1} parent=0 // pred_fallthru
    _
  %v21 = vld [vmem:[%s0] sm:$0xff]
  %v22 = vld [vmem:[%s0 + $0x8] sm:$0xff]
  %v23 = vpack.c.bf16 %v22, %v21
  %v24 = vld [vmem:[%s1] sm:$0xff]
  %v25 = vld [vmem:[%s1 + $0x8] sm:$0xf]
  %v26 = vld [vmem:[%s1 + $0xc] sm:$0xff]
  %v27 = vld [vmem:[%s1 + $0x14] sm:$0xf]
  %v28 = vld [vmem:[%s3] sm:$0x7]
  %v30 = vperm.slane %v28, 0
  %v31 = vperm.slane %v28, 1
  %v32 = vperm.slane %v28, 2
  %v40 = vunpack.c.l.b16 %v24
  %v41 = vunpack.c.h.b16 %v24
  %v42 = vunpack.c.l.b16 %v25
  %v43 = vunpack.c.l.b16 %v26
  %v44 = vunpack.c.h.b16 %v26
  %v45 = vunpack.c.l.b16 %v27
  %v46 = vpack.c.b16 %v43, %v40
  %v47 = vpack.c.b16 %v44, %v41
  %v48 = vpack.c.b16 %v45, %v42
  %vm52 = vcmask 130048
  %v54 = vsel %vm52, %v23, 0
  %56 = vmatpush.bf16.msra.mxu0 0
  %57 = vmatpush.bf16.msra.mxu0 0
  %58 = vmatpush.bf16.msra.mxu0 0
  %59 = vmatpush.bf16.msra.mxu0 0
  %60 = vmatpush.bf16.msra.mxu0 0
  %61 = vmatpush.bf16.msra.mxu0 0
  %62 = vmatpush.bf16.msra.mxu0 0
  %63 = vmatpush.bf16.msra.mxu0 %v46
  %64 = vmatmul.bf16.gmra.mxu0 %v54
  %v65 = vpop.f32.mrf.mxu0
  %v66 = vadd.f32 %v30, %v65
  %v67 = vpop.f32.mrf.mxu0
  %v68 = vadd.f32 %v30, %v67
  %69 = vdwg.mxu0
  %70 = vmatpush.bf16.msra.mxu0 0
  %71 = vmatpush.bf16.msra.mxu0 0
  %72 = vmatpush.bf16.msra.mxu0 0
  %73 = vmatpush.bf16.msra.mxu0 0
  %74 = vmatpush.bf16.msra.mxu0 0
  %75 = vmatpush.bf16.msra.mxu0 0
  %76 = vmatpush.bf16.msra.mxu0 0
  %77 = vmatpush.bf16.msra.mxu0 %v47
  %78 = vmatmul.bf16.gmra.mxu0 %v54
  %v79 = vpop.f32.mrf.mxu0
  %v80 = vadd.f32 %v31, %v79
  %v81 = vpop.f32.mrf.mxu0
  %v82 = vadd.f32 %v31, %v81
  %83 = vdwg.mxu0
  %84 = vmatpush.bf16.msra.mxu0 0
  %85 = vmatpush.bf16.msra.mxu0 0
  %86 = vmatpush.bf16.msra.mxu0 0
  %87 = vmatpush.bf16.msra.mxu0 0
  %88 = vmatpush.bf16.msra.mxu0 0
  %89 = vmatpush.bf16.msra.mxu0 0
  %90 = vmatpush.bf16.msra.mxu0 0
  %91 = vmatpush.bf16.msra.mxu0 %v48
  %92 = vmatmul.bf16.gmra.mxu0 %v54
  %v93 = vpop.f32.mrf.mxu0
  %v94 = vadd.f32 %v32, %v93
  %v95 = vpop.f32.mrf.mxu0
  %v96 = vadd.f32 %v32, %v95
  %97 = vdwg.mxu0
  %v98 = vld [vmem:[%s2] sm:$0xff]
  %v99 = vld [vmem:[%s2 + $0x8] sm:$0xff]
  %v100 = vld [vmem:[%s2 + $0x10] sm:$0xff]
  %v101 = vld [vmem:[%s2 + $0x18] sm:$0xff]
  %v102 = vld [vmem:[%s2 + $0x20] sm:$0xff]
  %v103 = vld [vmem:[%s2 + $0x28] sm:$0xff]
  %v104 = vld [vmem:[%s2 + $0x30] sm:$0xff]
  %v105 = vld [vmem:[%s2 + $0x38] sm:$0xff]
  %v106 = vld [vmem:[%s2 + $0x40] sm:$0xff]
  %v107 = vld [vmem:[%s2 + $0x48] sm:$0xff]
  %v108 = vld [vmem:[%s2 + $0x50] sm:$0xff]
  %v109 = vld [vmem:[%s2 + $0x58] sm:$0xff]
  %v110 = vld [vmem:[%s2 + $0x60] sm:$0xff]
  %v111 = vld [vmem:[%s2 + $0x68] sm:$0xff]
  %v112 = vld [vmem:[%s2 + $0x70] sm:$0xff]
  %v113 = vld [vmem:[%s2 + $0x78] sm:$0xff]
  %v114 = vld [vmem:[%s2 + $0x80] sm:$0xff]
  %v115 = vld [vmem:[%s2 + $0x88] sm:$0xff]
  %v116 = vld [vmem:[%s2 + $0x90] sm:$0xff]
  %v117 = vld [vmem:[%s2 + $0x98] sm:$0xff]
  %v118 = vld [vmem:[%s2 + $0xa0] sm:$0xff]
  %v119 = vld [vmem:[%s2 + $0xa8] sm:$0xff]
  %v120 = vld [vmem:[%s2 + $0xb0] sm:$0xff]
  %v121 = vld [vmem:[%s2 + $0xb8] sm:$0xff]
  %v122 = vld [vmem:[%s2 + $0xc0] sm:$0xff]
  %v123 = vld [vmem:[%s2 + $0xc8] sm:$0xff]
  %v124 = vld [vmem:[%s2 + $0xd0] sm:$0xff]
  %v125 = vld [vmem:[%s2 + $0xd8] sm:$0xff]
  %v126 = vld [vmem:[%s2 + $0xe0] sm:$0xff]
  %v127 = vld [vmem:[%s2 + $0xe8] sm:$0xff]
  %v128 = vld [vmem:[%s2 + $0xf0] sm:$0xff]
  %v129 = vld [vmem:[%s2 + $0xf8] sm:$0xff]
  %v130 = vld [vmem:[%s2 + $0x100] sm:$0xff]
  %v131 = vld [vmem:[%s2 + $0x108] sm:$0xff]
  %v132 = vld [vmem:[%s2 + $0x110] sm:$0xff]
  %v133 = vld [vmem:[%s2 + $0x118] sm:$0xff]
  %v134 = vld [vmem:[%s2 + $0x120] sm:$0xff]
  %v135 = vld [vmem:[%s2 + $0x128] sm:$0xff]
  %v136 = vld [vmem:[%s2 + $0x130] sm:$0xff]
  %v137 = vld [vmem:[%s2 + $0x138] sm:$0xff]
  %v138 = vld [vmem:[%s2 + $0x140] sm:$0xff]
  %v139 = vld [vmem:[%s2 + $0x148] sm:$0xff]
  %v140 = vld [vmem:[%s2 + $0x150] sm:$0xff]
  %v141 = vld [vmem:[%s2 + $0x158] sm:$0xff]
  %v142 = vld [vmem:[%s2 + $0x160] sm:$0xff]
  %v143 = vld [vmem:[%s2 + $0x168] sm:$0xff]
  %v144 = vld [vmem:[%s2 + $0x170] sm:$0xff]
  %v145 = vld [vmem:[%s2 + $0x178] sm:$0xff]
  %v146 = vld [vmem:[%s4] sm:$0x7]
  %v148 = vperm.slane %v146, 0
  %v149 = vperm.slane %v146, 1
  %v150 = vperm.slane %v146, 2
  %154 = vmatpush.msra.mxu0 %v143
  %155 = vmatpush.msra.mxu0 %v140
  %156 = vmatpush.msra.mxu0 %v137
  %157 = vmatpush.msra.mxu0 %v134
  %158 = vmatpush.msra.mxu0 %v131
  %159 = vmatpush.msra.mxu0 %v128
  %160 = vmatpush.msra.mxu0 %v125
  %161 = vmatpush.msra.mxu0 %v122
  %162 = vmatpush.msra.mxu0 %v119
  %163 = vmatpush.msra.mxu0 %v116
  %164 = vmatpush.msra.mxu0 %v113
  %165 = vmatpush.msra.mxu0 %v110
  %166 = vmatpush.msra.mxu0 %v107
  %167 = vmatpush.msra.mxu0 %v104
  %168 = vmatpush.msra.mxu0 %v101
  %169 = vmatpush.msra.mxu0 %v98
  %170 = vmatmul.f32.gmra.mxu0 0.0
  %v171 = vpop.f32.mrf.mxu0
  %v172 = vadd.f32 %v148, %v171
  %173 = vdwg.mxu0
  %174 = vmatpush.msra.mxu0 %v144
  %175 = vmatpush.msra.mxu0 %v141
  %176 = vmatpush.msra.mxu0 %v138
  %177 = vmatpush.msra.mxu0 %v135
  %178 = vmatpush.msra.mxu0 %v132
  %179 = vmatpush.msra.mxu0 %v129
  %180 = vmatpush.msra.mxu0 %v126
  %181 = vmatpush.msra.mxu0 %v123
  %182 = vmatpush.msra.mxu0 %v120
  %183 = vmatpush.msra.mxu0 %v117
  %184 = vmatpush.msra.mxu0 %v114
  %185 = vmatpush.msra.mxu0 %v111
  %186 = vmatpush.msra.mxu0 %v108
  %187 = vmatpush.msra.mxu0 %v105
  %188 = vmatpush.msra.mxu0 %v102
  %189 = vmatpush.msra.mxu0 %v99
  %190 = vmatmul.f32.gmra.mxu0 0.0
  %v191 = vpop.f32.mrf.mxu0
  %v192 = vadd.f32 %v149, %v191
  %193 = vdwg.mxu0
  %194 = vmatpush.msra.mxu0 %v145
  %195 = vmatpush.msra.mxu0 %v142
  %196 = vmatpush.msra.mxu0 %v139
  %197 = vmatpush.msra.mxu0 %v136
  %198 = vmatpush.msra.mxu0 %v133
  %199 = vmatpush.msra.mxu0 %v130
  %200 = vmatpush.msra.mxu0 %v127
  %201 = vmatpush.msra.mxu0 %v124
  %202 = vmatpush.msra.mxu0 %v121
  %203 = vmatpush.msra.mxu0 %v118
  %204 = vmatpush.msra.mxu0 %v115
  %205 = vmatpush.msra.mxu0 %v112
  %206 = vmatpush.msra.mxu0 %v109
  %207 = vmatpush.msra.mxu0 %v106
  %208 = vmatpush.msra.mxu0 %v103
  %209 = vmatpush.msra.mxu0 %v100
  %210 = vmatmul.f32.gmra.mxu0 0.0
  %v211 = vpop.f32.mrf.mxu0
  %v212 = vadd.f32 %v150, %v211
  %213 = vdwg.mxu0
  %v215 = vrot.slane %v172, 1
  %v218 = vadd.f32 %v66, %v172
  %v219 = vadd.f32 %v68, %v215
  %v220 = vxor.u32 %v218, 2147483648
  %v221 = vxor.u32 %v219, 2147483648
  %v222 = vmul.f32 %v220, 1.442695
  %v223 = vpow.pop %v222
  %v224 = vmul.f32 %v221, 1.442695
  %v225 = vpow.pop %v224
  %v226 = vadd.f32 %v223, 1.0
  %v227 = vadd.f32 %v225, 1.0
  %v228 = vrcp.pop %v226
  %v229 = vmul.f32 %v226, %v228
  %v230 = vsub.f32 1.0, %v229
  %v231 = vmul.f32 %v228, %v230
  %v232 = vadd.f32 %v228, %v231
  %vm233 = vweird.f32 %v226
  %vm234 = vweird.f32 %v228
  %vm235 = vmor %vm233, %vm234
  %v236 = vsel %vm235, %v228, %v232
  %v237 = vand.u32 2147483647, %v226
  %vm238 = vcmp.eq.f32.partialorder %v237, 8.507059e+37
  %v239 = vand.u32 %v226, 2147483648
  %v240 = vor.u32 1.1754944e-38, %v239
  %v241 = vsel %vm238, %v240, %v236
  %v242 = vmul.f32 1.0, %v241
  %v243 = vrcp.pop %v227
  %v244 = vmul.f32 %v227, %v243
  %v245 = vsub.f32 1.0, %v244
  %v246 = vmul.f32 %v243, %v245
  %v247 = vadd.f32 %v243, %v246
  %vm248 = vweird.f32 %v227
  %vm249 = vweird.f32 %v243
  %vm250 = vmor %vm248, %vm249
  %v251 = vsel %vm250, %v243, %v247
  %v252 = vand.u32 2147483647, %v227
  %vm253 = vcmp.eq.f32.partialorder %v252, 8.507059e+37
  %v254 = vand.u32 %v227, 2147483648
  %v255 = vor.u32 1.1754944e-38, %v254
  %v256 = vsel %vm253, %v255, %v251
  %v257 = vmul.f32 1.0, %v256
  %v259 = vrot.slane %v192, 1
  %v262 = vadd.f32 %v80, %v192
  %v263 = vadd.f32 %v82, %v259
  %v264 = vxor.u32 %v262, 2147483648
  %v265 = vxor.u32 %v263, 2147483648
  %v266 = vmul.f32 %v264, 1.442695
  %v267 = vpow.pop %v266
  %v268 = vmul.f32 %v265, 1.442695
  %v269 = vpow.pop %v268
  %v270 = vadd.f32 %v267, 1.0
  %v271 = vadd.f32 %v269, 1.0
  %v272 = vrcp.pop %v270
  %v273 = vmul.f32 %v270, %v272
  %v274 = vsub.f32 1.0, %v273
  %v275 = vmul.f32 %v272, %v274
  %v276 = vadd.f32 %v272, %v275
  %vm277 = vweird.f32 %v270
  %vm278 = vweird.f32 %v272
  %vm279 = vmor %vm277, %vm278
  %v280 = vsel %vm279, %v272, %v276
  %v281 = vand.u32 2147483647, %v270
  %vm282 = vcmp.eq.f32.partialorder %v281, 8.507059e+37
  %v283 = vand.u32 %v270, 2147483648
  %v284 = vor.u32 1.1754944e-38, %v283
  %v285 = vsel %vm282, %v284, %v280
  %v286 = vmul.f32 1.0, %v285
  %v287 = vrcp.pop %v271
  %v288 = vmul.f32 %v271, %v287
  %v289 = vsub.f32 1.0, %v288
  %v290 = vmul.f32 %v287, %v289
  %v291 = vadd.f32 %v287, %v290
  %vm292 = vweird.f32 %v271
  %vm293 = vweird.f32 %v287
  %vm294 = vmor %vm292, %vm293
  %v295 = vsel %vm294, %v287, %v291
  %v296 = vand.u32 2147483647, %v271
  %vm297 = vcmp.eq.f32.partialorder %v296, 8.507059e+37
  %v298 = vand.u32 %v271, 2147483648
  %v299 = vor.u32 1.1754944e-38, %v298
  %v300 = vsel %vm297, %v299, %v295
  %v301 = vmul.f32 1.0, %v300
  %v303 = vrot.slane %v212, 1
  %v306 = vmul.f32 %v242, %v212
  %v307 = vmul.f32 %v257, %v303
  %v308 = vadd.f32 %v94, %v306
  %v309 = vadd.f32 %v96, %v307
  %v310 = vtanh.pop %v308
  %v311 = vtanh.pop %v309
  %v312 = vsub.f32 0.0, %v310
  %v313 = vsub.f32 0.0, %v311
  %v314 = vmul.f32 %v286, %v312
  %v315 = vmul.f32 %v301, %v313
  %v316 = vadd.f32 %v310, %v314
  %v317 = vadd.f32 %v311, %v315
  %v320 = vrot.slane %v317, 7
  %vm321 = vcmask 1041409
  %v322 = vsel %vm321, %v320, %v316
  %324 = vmatpush.msra.mxu0 %v143
  %325 = vmatpush.msra.mxu0 %v140
  %326 = vmatpush.msra.mxu0 %v137
  %327 = vmatpush.msra.mxu0 %v134
  %328 = vmatpush.msra.mxu0 %v131
  %329 = vmatpush.msra.mxu0 %v128
  %330 = vmatpush.msra.mxu0 %v125
  %331 = vmatpush.msra.mxu0 %v122
  %332 = vmatpush.msra.mxu0 %v119
  %333 = vmatpush.msra.mxu0 %v116
  %334 = vmatpush.msra.mxu0 %v113
  %335 = vmatpush.msra.mxu0 %v110
  %336 = vmatpush.msra.mxu0 %v107
  %337 = vmatpush.msra.mxu0 %v104
  %338 = vmatpush.msra.mxu0 %v101
  %339 = vmatpush.msra.mxu0 %v98
  %340 = vmatmul.f32.gmra.mxu0 %v322
  %v341 = vpop.f32.mrf.mxu0
  %v342 = vadd.f32 %v148, %v341
  %343 = vdwg.mxu0
  %344 = vmatpush.msra.mxu0 %v144
  %345 = vmatpush.msra.mxu0 %v141
  %346 = vmatpush.msra.mxu0 %v138
  %347 = vmatpush.msra.mxu0 %v135
  %348 = vmatpush.msra.mxu0 %v132
  %349 = vmatpush.msra.mxu0 %v129
  %350 = vmatpush.msra.mxu0 %v126
  %351 = vmatpush.msra.mxu0 %v123
  %352 = vmatpush.msra.mxu0 %v120
  %353 = vmatpush.msra.mxu0 %v117
  %354 = vmatpush.msra.mxu0 %v114
  %355 = vmatpush.msra.mxu0 %v111
  %356 = vmatpush.msra.mxu0 %v108
  %357 = vmatpush.msra.mxu0 %v105
  %358 = vmatpush.msra.mxu0 %v102
  %359 = vmatpush.msra.mxu0 %v99
  %360 = vmatmul.f32.gmra.mxu0 %v322
  %v361 = vpop.f32.mrf.mxu0
  %v362 = vadd.f32 %v149, %v361
  %363 = vdwg.mxu0
  %364 = vmatpush.msra.mxu0 %v145
  %365 = vmatpush.msra.mxu0 %v142
  %366 = vmatpush.msra.mxu0 %v139
  %367 = vmatpush.msra.mxu0 %v136
  %368 = vmatpush.msra.mxu0 %v133
  %369 = vmatpush.msra.mxu0 %v130
  %370 = vmatpush.msra.mxu0 %v127
  %371 = vmatpush.msra.mxu0 %v124
  %372 = vmatpush.msra.mxu0 %v121
  %373 = vmatpush.msra.mxu0 %v118
  %374 = vmatpush.msra.mxu0 %v115
  %375 = vmatpush.msra.mxu0 %v112
  %376 = vmatpush.msra.mxu0 %v109
  %377 = vmatpush.msra.mxu0 %v106
  %378 = vmatpush.msra.mxu0 %v103
  %379 = vmatpush.msra.mxu0 %v100
  %380 = vmatmul.f32.gmra.mxu0 %v322
  %v381 = vpop.f32.mrf.mxu0
  %v382 = vadd.f32 %v150, %v381
  %383 = vdwg.mxu0
  %v385 = vrot.slane %v342, 7
  %v388 = vadd.f32 %v66, %v385
  %v389 = vadd.f32 %v68, %v342
  %v390 = vxor.u32 %v388, 2147483648
  %v391 = vxor.u32 %v389, 2147483648
  %v392 = vmul.f32 %v390, 1.442695
  %v393 = vpow.pop %v392
  %v394 = vmul.f32 %v391, 1.442695
  %v395 = vpow.pop %v394
  %v396 = vadd.f32 %v393, 1.0
  %v397 = vadd.f32 %v395, 1.0
  %v398 = vrcp.pop %v396
  %v399 = vmul.f32 %v396, %v398
  %v400 = vsub.f32 1.0, %v399
  %v401 = vmul.f32 %v398, %v400
  %v402 = vadd.f32 %v398, %v401
  %vm403 = vweird.f32 %v396
  %vm404 = vweird.f32 %v398
  %vm405 = vmor %vm403, %vm404
  %v406 = vsel %vm405, %v398, %v402
  %v407 = vand.u32 2147483647, %v396
  %vm408 = vcmp.eq.f32.partialorder %v407, 8.507059e+37
  %v409 = vand.u32 %v396, 2147483648
  %v410 = vor.u32 1.1754944e-38, %v409
  %v411 = vsel %vm408, %v410, %v406
  %v412 = vmul.f32 1.0, %v411
  %v413 = vrcp.pop %v397
  %v414 = vmul.f32 %v397, %v413
  %v415 = vsub.f32 1.0, %v414
  %v416 = vmul.f32 %v413, %v415
  %v417 = vadd.f32 %v413, %v416
  %vm418 = vweird.f32 %v397
  %vm419 = vweird.f32 %v413
  %vm420 = vmor %vm418, %vm419
  %v421 = vsel %vm420, %v413, %v417
  %v422 = vand.u32 2147483647, %v397
  %vm423 = vcmp.eq.f32.partialorder %v422, 8.507059e+37
  %v424 = vand.u32 %v397, 2147483648
  %v425 = vor.u32 1.1754944e-38, %v424
  %v426 = vsel %vm423, %v425, %v421
  %v427 = vmul.f32 1.0, %v426
  %v429 = vrot.slane %v362, 7
  %v432 = vadd.f32 %v80, %v429
  %v433 = vadd.f32 %v82, %v362
  %v434 = vxor.u32 %v432, 2147483648
  %v435 = vxor.u32 %v433, 2147483648
  %v436 = vmul.f32 %v434, 1.442695
  %v437 = vpow.pop %v436
  %v438 = vmul.f32 %v435, 1.442695
  %v439 = vpow.pop %v438
  %v440 = vadd.f32 %v437, 1.0
  %v441 = vadd.f32 %v439, 1.0
  %v442 = vrcp.pop %v440
  %v443 = vmul.f32 %v440, %v442
  %v444 = vsub.f32 1.0, %v443
  %v445 = vmul.f32 %v442, %v444
  %v446 = vadd.f32 %v442, %v445
  %vm447 = vweird.f32 %v440
  %vm448 = vweird.f32 %v442
  %vm449 = vmor %vm447, %vm448
  %v450 = vsel %vm449, %v442, %v446
  %v451 = vand.u32 2147483647, %v440
  %vm452 = vcmp.eq.f32.partialorder %v451, 8.507059e+37
  %v453 = vand.u32 %v440, 2147483648
  %v454 = vor.u32 1.1754944e-38, %v453
  %v455 = vsel %vm452, %v454, %v450
  %v456 = vmul.f32 1.0, %v455
  %v457 = vrcp.pop %v441
  %v458 = vmul.f32 %v441, %v457
  %v459 = vsub.f32 1.0, %v458
  %v460 = vmul.f32 %v457, %v459
  %v461 = vadd.f32 %v457, %v460
  %vm462 = vweird.f32 %v441
  %vm463 = vweird.f32 %v457
  %vm464 = vmor %vm462, %vm463
  %v465 = vsel %vm464, %v457, %v461
  %v466 = vand.u32 2147483647, %v441
  %vm467 = vcmp.eq.f32.partialorder %v466, 8.507059e+37
  %v468 = vand.u32 %v441, 2147483648
  %v469 = vor.u32 1.1754944e-38, %v468
  %v470 = vsel %vm467, %v469, %v465
  %v471 = vmul.f32 1.0, %v470
  %v473 = vrot.slane %v382, 7
  %v476 = vmul.f32 %v412, %v473
  %v477 = vmul.f32 %v427, %v382
  %v478 = vadd.f32 %v94, %v476
  %v479 = vadd.f32 %v96, %v477
  %v480 = vtanh.pop %v478
  %v481 = vtanh.pop %v479
  %v484 = vrot.slane %v480, 1
  %v485 = vrot.slane %v481, 1
  %v488 = vsub.f32 %v316, %v484
  %v489 = vsub.f32 %v317, %v485
  %v492 = vrot.slane %v488, 7
  %v493 = vrot.slane %v489, 7
  %v496 = vmul.f32 %v456, %v492
  %v497 = vmul.f32 %v471, %v493
  %v498 = vadd.f32 %v480, %v496
  %v499 = vadd.f32 %v481, %v497
  %v502 = vrot.slane %v498, 1
  %v503 = vsel %vm321, %v499, %v502
  %505 = vmatpush.msra.mxu0 %v143
  %506 = vmatpush.msra.mxu0 %v140
  %507 = vmatpush.msra.mxu0 %v137
  %508 = vmatpush.msra.mxu0 %v134
  %509 = vmatpush.msra.mxu0 %v131
  %510 = vmatpush.msra.mxu0 %v128
  %511 = vmatpush.msra.mxu0 %v125
  %512 = vmatpush.msra.mxu0 %v122
  %513 = vmatpush.msra.mxu0 %v119
  %514 = vmatpush.msra.mxu0 %v116
  %515 = vmatpush.msra.mxu0 %v113
  %516 = vmatpush.msra.mxu0 %v110
  %517 = vmatpush.msra.mxu0 %v107
  %518 = vmatpush.msra.mxu0 %v104
  %519 = vmatpush.msra.mxu0 %v101
  %520 = vmatpush.msra.mxu0 %v98
  %521 = vmatmul.f32.gmra.mxu0 %v503
  %v522 = vpop.f32.mrf.mxu0
  %v523 = vadd.f32 %v148, %v522
  %524 = vdwg.mxu0
  %525 = vmatpush.msra.mxu0 %v144
  %526 = vmatpush.msra.mxu0 %v141
  %527 = vmatpush.msra.mxu0 %v138
  %528 = vmatpush.msra.mxu0 %v135
  %529 = vmatpush.msra.mxu0 %v132
  %530 = vmatpush.msra.mxu0 %v129
  %531 = vmatpush.msra.mxu0 %v126
  %532 = vmatpush.msra.mxu0 %v123
  %533 = vmatpush.msra.mxu0 %v120
  %534 = vmatpush.msra.mxu0 %v117
  %535 = vmatpush.msra.mxu0 %v114
  %536 = vmatpush.msra.mxu0 %v111
  %537 = vmatpush.msra.mxu0 %v108
  %538 = vmatpush.msra.mxu0 %v105
  %539 = vmatpush.msra.mxu0 %v102
  %540 = vmatpush.msra.mxu0 %v99
  %541 = vmatmul.f32.gmra.mxu0 %v503
  %v542 = vpop.f32.mrf.mxu0
  %v543 = vadd.f32 %v149, %v542
  %544 = vdwg.mxu0
  %545 = vmatpush.msra.mxu0 %v145
  %546 = vmatpush.msra.mxu0 %v142
  %547 = vmatpush.msra.mxu0 %v139
  %548 = vmatpush.msra.mxu0 %v136
  %549 = vmatpush.msra.mxu0 %v133
  %550 = vmatpush.msra.mxu0 %v130
  %551 = vmatpush.msra.mxu0 %v127
  %552 = vmatpush.msra.mxu0 %v124
  %553 = vmatpush.msra.mxu0 %v121
  %554 = vmatpush.msra.mxu0 %v118
  %555 = vmatpush.msra.mxu0 %v115
  %556 = vmatpush.msra.mxu0 %v112
  %557 = vmatpush.msra.mxu0 %v109
  %558 = vmatpush.msra.mxu0 %v106
  %559 = vmatpush.msra.mxu0 %v103
  %560 = vmatpush.msra.mxu0 %v100
  %561 = vmatmul.f32.gmra.mxu0 %v503
  %v562 = vpop.f32.mrf.mxu0
  %v563 = vadd.f32 %v150, %v562
  %564 = vdwg.mxu0
  %v566 = vrot.slane %v523, 6
  %v567 = vrot.slane %v523, 7
  %v570 = vadd.f32 %v66, %v566
  %v571 = vadd.f32 %v68, %v567
  %v572 = vxor.u32 %v570, 2147483648
  %v573 = vxor.u32 %v571, 2147483648
  %v574 = vmul.f32 %v572, 1.442695
  %v575 = vpow.pop %v574
  %v576 = vmul.f32 %v573, 1.442695
  %v577 = vpow.pop %v576
  %v578 = vadd.f32 %v575, 1.0
  %v579 = vadd.f32 %v577, 1.0
  %v580 = vrcp.pop %v578
  %v581 = vmul.f32 %v578, %v580
  %v582 = vsub.f32 1.0, %v581
  %v583 = vmul.f32 %v580, %v582
  %v584 = vadd.f32 %v580, %v583
  %vm585 = vweird.f32 %v578
  %vm586 = vweird.f32 %v580
  %vm587 = vmor %vm585, %vm586
  %v588 = vsel %vm587, %v580, %v584
  %v589 = vand.u32 2147483647, %v578
  %vm590 = vcmp.eq.f32.partialorder %v589, 8.507059e+37
  %v591 = vand.u32 %v578, 2147483648
  %v592 = vor.u32 1.1754944e-38, %v591
  %v593 = vsel %vm590, %v592, %v588
  %v594 = vmul.f32 1.0, %v593
  %v595 = vrcp.pop %v579
  %v596 = vmul.f32 %v579, %v595
  %v597 = vsub.f32 1.0, %v596
  %v598 = vmul.f32 %v595, %v597
  %v599 = vadd.f32 %v595, %v598
  %vm600 = vweird.f32 %v579
  %vm601 = vweird.f32 %v595
  %vm602 = vmor %vm600, %vm601
  %v603 = vsel %vm602, %v595, %v599
  %v604 = vand.u32 2147483647, %v579
  %vm605 = vcmp.eq.f32.partialorder %v604, 8.507059e+37
  %v606 = vand.u32 %v579, 2147483648
  %v607 = vor.u32 1.1754944e-38, %v606
  %v608 = vsel %vm605, %v607, %v603
  %v609 = vmul.f32 1.0, %v608
  %v611 = vrot.slane %v543, 6
  %v612 = vrot.slane %v543, 7
  %v615 = vadd.f32 %v80, %v611
  %v616 = vadd.f32 %v82, %v612
  %v617 = vxor.u32 %v615, 2147483648
  %v618 = vxor.u32 %v616, 2147483648
  %v619 = vmul.f32 %v617, 1.442695
  %v620 = vpow.pop %v619
  %v621 = vmul.f32 %v618, 1.442695
  %v622 = vpow.pop %v621
  %v623 = vadd.f32 %v620, 1.0
  %v624 = vadd.f32 %v622, 1.0
  %v625 = vrcp.pop %v623
  %v626 = vmul.f32 %v623, %v625
  %v627 = vsub.f32 1.0, %v626
  %v628 = vmul.f32 %v625, %v627
  %v629 = vadd.f32 %v625, %v628
  %vm630 = vweird.f32 %v623
  %vm631 = vweird.f32 %v625
  %vm632 = vmor %vm630, %vm631
  %v633 = vsel %vm632, %v625, %v629
  %v634 = vand.u32 2147483647, %v623
  %vm635 = vcmp.eq.f32.partialorder %v634, 8.507059e+37
  %v636 = vand.u32 %v623, 2147483648
  %v637 = vor.u32 1.1754944e-38, %v636
  %v638 = vsel %vm635, %v637, %v633
  %v639 = vmul.f32 1.0, %v638
  %v640 = vrcp.pop %v624
  %v641 = vmul.f32 %v624, %v640
  %v642 = vsub.f32 1.0, %v641
  %v643 = vmul.f32 %v640, %v642
  %v644 = vadd.f32 %v640, %v643
  %vm645 = vweird.f32 %v624
  %vm646 = vweird.f32 %v640
  %vm647 = vmor %vm645, %vm646
  %v648 = vsel %vm647, %v640, %v644
  %v649 = vand.u32 2147483647, %v624
  %vm650 = vcmp.eq.f32.partialorder %v649, 8.507059e+37
  %v651 = vand.u32 %v624, 2147483648
  %v652 = vor.u32 1.1754944e-38, %v651
  %v653 = vsel %vm650, %v652, %v648
  %v654 = vmul.f32 1.0, %v653
  %v656 = vrot.slane %v563, 6
  %v657 = vrot.slane %v563, 7
  %v660 = vmul.f32 %v594, %v656
  %v661 = vmul.f32 %v609, %v657
  %v662 = vadd.f32 %v94, %v660
  %v663 = vadd.f32 %v96, %v661
  %v664 = vtanh.pop %v662
  %v665 = vtanh.pop %v663
  %v668 = vrot.slane %v664, 1
  %v669 = vrot.slane %v665, 1
  %v672 = vsub.f32 %v498, %v668
  %v673 = vsub.f32 %v499, %v669
  %v676 = vrot.slane %v672, 7
  %v677 = vrot.slane %v673, 7
  %v680 = vmul.f32 %v639, %v676
  %v681 = vmul.f32 %v654, %v677
  %v682 = vadd.f32 %v664, %v680
  %v683 = vadd.f32 %v665, %v681
  %v686 = vrot.slane %v682, 2
  %v687 = vrot.slane %v683, 1
  %v688 = vsel %vm321, %v687, %v686
  %690 = vmatpush.msra.mxu0 %v143
  %691 = vmatpush.msra.mxu0 %v140
  %692 = vmatpush.msra.mxu0 %v137
  %693 = vmatpush.msra.mxu0 %v134
  %694 = vmatpush.msra.mxu0 %v131
  %695 = vmatpush.msra.mxu0 %v128
  %696 = vmatpush.msra.mxu0 %v125
  %697 = vmatpush.msra.mxu0 %v122
  %698 = vmatpush.msra.mxu0 %v119
  %699 = vmatpush.msra.mxu0 %v116
  %700 = vmatpush.msra.mxu0 %v113
  %701 = vmatpush.msra.mxu0 %v110
  %702 = vmatpush.msra.mxu0 %v107
  %703 = vmatpush.msra.mxu0 %v104
  %704 = vmatpush.msra.mxu0 %v101
  %705 = vmatpush.msra.mxu0 %v98
  %706 = vmatmul.f32.gmra.mxu0 %v688
  %v707 = vpop.f32.mrf.mxu0
  %v708 = vadd.f32 %v148, %v707
  %709 = vdwg.mxu0
  %710 = vmatpush.msra.mxu0 %v144
  %711 = vmatpush.msra.mxu0 %v141
  %712 = vmatpush.msra.mxu0 %v138
  %713 = vmatpush.msra.mxu0 %v135
  %714 = vmatpush.msra.mxu0 %v132
  %715 = vmatpush.msra.mxu0 %v129
  %716 = vmatpush.msra.mxu0 %v126
  %717 = vmatpush.msra.mxu0 %v123
  %718 = vmatpush.msra.mxu0 %v120
  %719 = vmatpush.msra.mxu0 %v117
  %720 = vmatpush.msra.mxu0 %v114
  %721 = vmatpush.msra.mxu0 %v111
  %722 = vmatpush.msra.mxu0 %v108
  %723 = vmatpush.msra.mxu0 %v105
  %724 = vmatpush.msra.mxu0 %v102
  %725 = vmatpush.msra.mxu0 %v99
  %726 = vmatmul.f32.gmra.mxu0 %v688
  %v727 = vpop.f32.mrf.mxu0
  %v728 = vadd.f32 %v149, %v727
  %729 = vdwg.mxu0
  %730 = vmatpush.msra.mxu0 %v145
  %731 = vmatpush.msra.mxu0 %v142
  %732 = vmatpush.msra.mxu0 %v139
  %733 = vmatpush.msra.mxu0 %v136
  %734 = vmatpush.msra.mxu0 %v133
  %735 = vmatpush.msra.mxu0 %v130
  %736 = vmatpush.msra.mxu0 %v127
  %737 = vmatpush.msra.mxu0 %v124
  %738 = vmatpush.msra.mxu0 %v121
  %739 = vmatpush.msra.mxu0 %v118
  %740 = vmatpush.msra.mxu0 %v115
  %741 = vmatpush.msra.mxu0 %v112
  %742 = vmatpush.msra.mxu0 %v109
  %743 = vmatpush.msra.mxu0 %v106
  %744 = vmatpush.msra.mxu0 %v103
  %745 = vmatpush.msra.mxu0 %v100
  %746 = vmatmul.f32.gmra.mxu0 %v688
  %v747 = vpop.f32.mrf.mxu0
  %v748 = vadd.f32 %v150, %v747
  %749 = vdwg.mxu0
  %v751 = vrot.slane %v708, 5
  %v752 = vrot.slane %v708, 6
  %v755 = vadd.f32 %v66, %v751
  %v756 = vadd.f32 %v68, %v752
  %v757 = vxor.u32 %v755, 2147483648
  %v758 = vxor.u32 %v756, 2147483648
  %v759 = vmul.f32 %v757, 1.442695
  %v760 = vpow.pop %v759
  %v761 = vmul.f32 %v758, 1.442695
  %v762 = vpow.pop %v761
  %v763 = vadd.f32 %v760, 1.0
  %v764 = vadd.f32 %v762, 1.0
  %v765 = vrcp.pop %v763
  %v766 = vmul.f32 %v763, %v765
  %v767 = vsub.f32 1.0, %v766
  %v768 = vmul.f32 %v765, %v767
  %v769 = vadd.f32 %v765, %v768
  %vm770 = vweird.f32 %v763
  %vm771 = vweird.f32 %v765
  %vm772 = vmor %vm770, %vm771
  %v773 = vsel %vm772, %v765, %v769
  %v774 = vand.u32 2147483647, %v763
  %vm775 = vcmp.eq.f32.partialorder %v774, 8.507059e+37
  %v776 = vand.u32 %v763, 2147483648
  %v777 = vor.u32 1.1754944e-38, %v776
  %v778 = vsel %vm775, %v777, %v773
  %v779 = vmul.f32 1.0, %v778
  %v780 = vrcp.pop %v764
  %v781 = vmul.f32 %v764, %v780
  %v782 = vsub.f32 1.0, %v781
  %v783 = vmul.f32 %v780, %v782
  %v784 = vadd.f32 %v780, %v783
  %vm785 = vweird.f32 %v764
  %vm786 = vweird.f32 %v780
  %vm787 = vmor %vm785, %vm786
  %v788 = vsel %vm787, %v780, %v784
  %v789 = vand.u32 2147483647, %v764
  %vm790 = vcmp.eq.f32.partialorder %v789, 8.507059e+37
  %v791 = vand.u32 %v764, 2147483648
  %v792 = vor.u32 1.1754944e-38, %v791
  %v793 = vsel %vm790, %v792, %v788
  %v794 = vmul.f32 1.0, %v793
  %v796 = vrot.slane %v728, 5
  %v797 = vrot.slane %v728, 6
  %v800 = vadd.f32 %v80, %v796
  %v801 = vadd.f32 %v82, %v797
  %v802 = vxor.u32 %v800, 2147483648
  %v803 = vxor.u32 %v801, 2147483648
  %v804 = vmul.f32 %v802, 1.442695
  %v805 = vpow.pop %v804
  %v806 = vmul.f32 %v803, 1.442695
  %v807 = vpow.pop %v806
  %v808 = vadd.f32 %v805, 1.0
  %v809 = vadd.f32 %v807, 1.0
  %v810 = vrcp.pop %v808
  %v811 = vmul.f32 %v808, %v810
  %v812 = vsub.f32 1.0, %v811
  %v813 = vmul.f32 %v810, %v812
  %v814 = vadd.f32 %v810, %v813
  %vm815 = vweird.f32 %v808
  %vm816 = vweird.f32 %v810
  %vm817 = vmor %vm815, %vm816
  %v818 = vsel %vm817, %v810, %v814
  %v819 = vand.u32 2147483647, %v808
  %vm820 = vcmp.eq.f32.partialorder %v819, 8.507059e+37
  %v821 = vand.u32 %v808, 2147483648
  %v822 = vor.u32 1.1754944e-38, %v821
  %v823 = vsel %vm820, %v822, %v818
  %v824 = vmul.f32 1.0, %v823
  %v825 = vrcp.pop %v809
  %v826 = vmul.f32 %v809, %v825
  %v827 = vsub.f32 1.0, %v826
  %v828 = vmul.f32 %v825, %v827
  %v829 = vadd.f32 %v825, %v828
  %vm830 = vweird.f32 %v809
  %vm831 = vweird.f32 %v825
  %vm832 = vmor %vm830, %vm831
  %v833 = vsel %vm832, %v825, %v829
  %v834 = vand.u32 2147483647, %v809
  %vm835 = vcmp.eq.f32.partialorder %v834, 8.507059e+37
  %v836 = vand.u32 %v809, 2147483648
  %v837 = vor.u32 1.1754944e-38, %v836
  %v838 = vsel %vm835, %v837, %v833
  %v839 = vmul.f32 1.0, %v838
  %v841 = vrot.slane %v748, 5
  %v842 = vrot.slane %v748, 6
  %v845 = vmul.f32 %v779, %v841
  %v846 = vmul.f32 %v794, %v842
  %v847 = vadd.f32 %v94, %v845
  %v848 = vadd.f32 %v96, %v846
  %v849 = vtanh.pop %v847
  %v850 = vtanh.pop %v848
  %v853 = vrot.slane %v849, 1
  %v854 = vrot.slane %v850, 1
  %v857 = vsub.f32 %v682, %v853
  %v858 = vsub.f32 %v683, %v854
  %v861 = vrot.slane %v857, 7
  %v862 = vrot.slane %v858, 7
  %v865 = vmul.f32 %v824, %v861
  %v866 = vmul.f32 %v839, %v862
  %v867 = vadd.f32 %v849, %v865
  %v868 = vadd.f32 %v850, %v866
  %v871 = vrot.slane %v867, 3
  %v872 = vrot.slane %v868, 2
  %v873 = vsel %vm321, %v872, %v871
  %875 = vmatpush.msra.mxu0 %v143
  %876 = vmatpush.msra.mxu0 %v140
  %877 = vmatpush.msra.mxu0 %v137
  %878 = vmatpush.msra.mxu0 %v134
  %879 = vmatpush.msra.mxu0 %v131
  %880 = vmatpush.msra.mxu0 %v128
  %881 = vmatpush.msra.mxu0 %v125
  %882 = vmatpush.msra.mxu0 %v122
  %883 = vmatpush.msra.mxu0 %v119
  %884 = vmatpush.msra.mxu0 %v116
  %885 = vmatpush.msra.mxu0 %v113
  %886 = vmatpush.msra.mxu0 %v110
  %887 = vmatpush.msra.mxu0 %v107
  %888 = vmatpush.msra.mxu0 %v104
  %889 = vmatpush.msra.mxu0 %v101
  %890 = vmatpush.msra.mxu0 %v98
  %891 = vmatmul.f32.gmra.mxu0 %v873
  %v892 = vpop.f32.mrf.mxu0
  %v893 = vadd.f32 %v148, %v892
  %894 = vdwg.mxu0
  %895 = vmatpush.msra.mxu0 %v144
  %896 = vmatpush.msra.mxu0 %v141
  %897 = vmatpush.msra.mxu0 %v138
  %898 = vmatpush.msra.mxu0 %v135
  %899 = vmatpush.msra.mxu0 %v132
  %900 = vmatpush.msra.mxu0 %v129
  %901 = vmatpush.msra.mxu0 %v126
  %902 = vmatpush.msra.mxu0 %v123
  %903 = vmatpush.msra.mxu0 %v120
  %904 = vmatpush.msra.mxu0 %v117
  %905 = vmatpush.msra.mxu0 %v114
  %906 = vmatpush.msra.mxu0 %v111
  %907 = vmatpush.msra.mxu0 %v108
  %908 = vmatpush.msra.mxu0 %v105
  %909 = vmatpush.msra.mxu0 %v102
  %910 = vmatpush.msra.mxu0 %v99
  %911 = vmatmul.f32.gmra.mxu0 %v873
  %v912 = vpop.f32.mrf.mxu0
  %v913 = vadd.f32 %v149, %v912
  %914 = vdwg.mxu0
  %915 = vmatpush.msra.mxu0 %v145
  %916 = vmatpush.msra.mxu0 %v142
  %917 = vmatpush.msra.mxu0 %v139
  %918 = vmatpush.msra.mxu0 %v136
  %919 = vmatpush.msra.mxu0 %v133
  %920 = vmatpush.msra.mxu0 %v130
  %921 = vmatpush.msra.mxu0 %v127
  %922 = vmatpush.msra.mxu0 %v124
  %923 = vmatpush.msra.mxu0 %v121
  %924 = vmatpush.msra.mxu0 %v118
  %925 = vmatpush.msra.mxu0 %v115
  %926 = vmatpush.msra.mxu0 %v112
  %927 = vmatpush.msra.mxu0 %v109
  %928 = vmatpush.msra.mxu0 %v106
  %929 = vmatpush.msra.mxu0 %v103
  %930 = vmatpush.msra.mxu0 %v100
  %931 = vmatmul.f32.gmra.mxu0 %v873
  %v932 = vpop.f32.mrf.mxu0
  %v933 = vadd.f32 %v150, %v932
  %934 = vdwg.mxu0
  %v936 = vrot.slane %v893, 4
  %v937 = vrot.slane %v893, 5
  %v940 = vadd.f32 %v66, %v936
  %v941 = vadd.f32 %v68, %v937
  %v942 = vxor.u32 %v940, 2147483648
  %v943 = vxor.u32 %v941, 2147483648
  %v944 = vmul.f32 %v942, 1.442695
  %v945 = vpow.pop %v944
  %v946 = vmul.f32 %v943, 1.442695
  %v947 = vpow.pop %v946
  %v948 = vadd.f32 %v945, 1.0
  %v949 = vadd.f32 %v947, 1.0
  %v950 = vrcp.pop %v948
  %v951 = vmul.f32 %v948, %v950
  %v952 = vsub.f32 1.0, %v951
  %v953 = vmul.f32 %v950, %v952
  %v954 = vadd.f32 %v950, %v953
  %vm955 = vweird.f32 %v948
  %vm956 = vweird.f32 %v950
  %vm957 = vmor %vm955, %vm956
  %v958 = vsel %vm957, %v950, %v954
  %v959 = vand.u32 2147483647, %v948
  %vm960 = vcmp.eq.f32.partialorder %v959, 8.507059e+37
  %v961 = vand.u32 %v948, 2147483648
  %v962 = vor.u32 1.1754944e-38, %v961
  %v963 = vsel %vm960, %v962, %v958
  %v964 = vmul.f32 1.0, %v963
  %v965 = vrcp.pop %v949
  %v966 = vmul.f32 %v949, %v965
  %v967 = vsub.f32 1.0, %v966
  %v968 = vmul.f32 %v965, %v967
  %v969 = vadd.f32 %v965, %v968
  %vm970 = vweird.f32 %v949
  %vm971 = vweird.f32 %v965
  %vm972 = vmor %vm970, %vm971
  %v973 = vsel %vm972, %v965, %v969
  %v974 = vand.u32 2147483647, %v949
  %vm975 = vcmp.eq.f32.partialorder %v974, 8.507059e+37
  %v976 = vand.u32 %v949, 2147483648
  %v977 = vor.u32 1.1754944e-38, %v976
  %v978 = vsel %vm975, %v977, %v973
  %v979 = vmul.f32 1.0, %v978
  %v981 = vrot.slane %v913, 4
  %v982 = vrot.slane %v913, 5
  %v985 = vadd.f32 %v80, %v981
  %v986 = vadd.f32 %v82, %v982
  %v987 = vxor.u32 %v985, 2147483648
  %v988 = vxor.u32 %v986, 2147483648
  %v989 = vmul.f32 %v987, 1.442695
  %v990 = vpow.pop %v989
  %v991 = vmul.f32 %v988, 1.442695
  %v992 = vpow.pop %v991
  %v993 = vadd.f32 %v990, 1.0
  %v994 = vadd.f32 %v992, 1.0
  %v995 = vrcp.pop %v993
  %v996 = vmul.f32 %v993, %v995
  %v997 = vsub.f32 1.0, %v996
  %v998 = vmul.f32 %v995, %v997
  %v999 = vadd.f32 %v995, %v998
  %vm1000 = vweird.f32 %v993
  %vm1001 = vweird.f32 %v995
  %vm1002 = vmor %vm1000, %vm1001
  %v1003 = vsel %vm1002, %v995, %v999
  %v1004 = vand.u32 2147483647, %v993
  %vm1005 = vcmp.eq.f32.partialorder %v1004, 8.507059e+37
  %v1006 = vand.u32 %v993, 2147483648
  %v1007 = vor.u32 1.1754944e-38, %v1006
  %v1008 = vsel %vm1005, %v1007, %v1003
  %v1009 = vmul.f32 1.0, %v1008
  %v1010 = vrcp.pop %v994
  %v1011 = vmul.f32 %v994, %v1010
  %v1012 = vsub.f32 1.0, %v1011
  %v1013 = vmul.f32 %v1010, %v1012
  %v1014 = vadd.f32 %v1010, %v1013
  %vm1015 = vweird.f32 %v994
  %vm1016 = vweird.f32 %v1010
  %vm1017 = vmor %vm1015, %vm1016
  %v1018 = vsel %vm1017, %v1010, %v1014
  %v1019 = vand.u32 2147483647, %v994
  %vm1020 = vcmp.eq.f32.partialorder %v1019, 8.507059e+37
  %v1021 = vand.u32 %v994, 2147483648
  %v1022 = vor.u32 1.1754944e-38, %v1021
  %v1023 = vsel %vm1020, %v1022, %v1018
  %v1024 = vmul.f32 1.0, %v1023
  %v1026 = vrot.slane %v933, 4
  %v1027 = vrot.slane %v933, 5
  %v1030 = vmul.f32 %v964, %v1026
  %v1031 = vmul.f32 %v979, %v1027
  %v1032 = vadd.f32 %v94, %v1030
  %v1033 = vadd.f32 %v96, %v1031
  %v1034 = vtanh.pop %v1032
  %v1035 = vtanh.pop %v1033
  %v1038 = vrot.slane %v1034, 1
  %v1039 = vrot.slane %v1035, 1
  %v1042 = vsub.f32 %v867, %v1038
  %v1043 = vsub.f32 %v868, %v1039
  %v1046 = vrot.slane %v1042, 7
  %v1047 = vrot.slane %v1043, 7
  %v1050 = vmul.f32 %v1009, %v1046
  %v1051 = vmul.f32 %v1024, %v1047
  %v1052 = vadd.f32 %v1034, %v1050
  %v1053 = vadd.f32 %v1035, %v1051
  %v1056 = vrot.slane %v1052, 4
  %v1057 = vrot.slane %v1053, 3
  %v1058 = vsel %vm321, %v1057, %v1056
  %1060 = vmatpush.msra.mxu0 %v143
  %1061 = vmatpush.msra.mxu0 %v140
  %1062 = vmatpush.msra.mxu0 %v137
  %1063 = vmatpush.msra.mxu0 %v134
  %1064 = vmatpush.msra.mxu0 %v131
  %1065 = vmatpush.msra.mxu0 %v128
  %1066 = vmatpush.msra.mxu0 %v125
  %1067 = vmatpush.msra.mxu0 %v122
  %1068 = vmatpush.msra.mxu0 %v119
  %1069 = vmatpush.msra.mxu0 %v116
  %1070 = vmatpush.msra.mxu0 %v113
  %1071 = vmatpush.msra.mxu0 %v110
  %1072 = vmatpush.msra.mxu0 %v107
  %1073 = vmatpush.msra.mxu0 %v104
  %1074 = vmatpush.msra.mxu0 %v101
  %1075 = vmatpush.msra.mxu0 %v98
  %1076 = vmatmul.f32.gmra.mxu0 %v1058
  %v1077 = vpop.f32.mrf.mxu0
  %v1078 = vadd.f32 %v148, %v1077
  %1079 = vdwg.mxu0
  %1080 = vmatpush.msra.mxu0 %v144
  %1081 = vmatpush.msra.mxu0 %v141
  %1082 = vmatpush.msra.mxu0 %v138
  %1083 = vmatpush.msra.mxu0 %v135
  %1084 = vmatpush.msra.mxu0 %v132
  %1085 = vmatpush.msra.mxu0 %v129
  %1086 = vmatpush.msra.mxu0 %v126
  %1087 = vmatpush.msra.mxu0 %v123
  %1088 = vmatpush.msra.mxu0 %v120
  %1089 = vmatpush.msra.mxu0 %v117
  %1090 = vmatpush.msra.mxu0 %v114
  %1091 = vmatpush.msra.mxu0 %v111
  %1092 = vmatpush.msra.mxu0 %v108
  %1093 = vmatpush.msra.mxu0 %v105
  %1094 = vmatpush.msra.mxu0 %v102
  %1095 = vmatpush.msra.mxu0 %v99
  %1096 = vmatmul.f32.gmra.mxu0 %v1058
  %v1097 = vpop.f32.mrf.mxu0
  %v1098 = vadd.f32 %v149, %v1097
  %1099 = vdwg.mxu0
  %1100 = vmatpush.msra.mxu0 %v145
  %1101 = vmatpush.msra.mxu0 %v142
  %1102 = vmatpush.msra.mxu0 %v139
  %1103 = vmatpush.msra.mxu0 %v136
  %1104 = vmatpush.msra.mxu0 %v133
  %1105 = vmatpush.msra.mxu0 %v130
  %1106 = vmatpush.msra.mxu0 %v127
  %1107 = vmatpush.msra.mxu0 %v124
  %1108 = vmatpush.msra.mxu0 %v121
  %1109 = vmatpush.msra.mxu0 %v118
  %1110 = vmatpush.msra.mxu0 %v115
  %1111 = vmatpush.msra.mxu0 %v112
  %1112 = vmatpush.msra.mxu0 %v109
  %1113 = vmatpush.msra.mxu0 %v106
  %1114 = vmatpush.msra.mxu0 %v103
  %1115 = vmatpush.msra.mxu0 %v100
  %1116 = vmatmul.f32.gmra.mxu0 %v1058
  %v1117 = vpop.f32.mrf.mxu0
  %v1118 = vadd.f32 %v150, %v1117
  %1119 = vdwg.mxu0
  %v1121 = vrot.slane %v1078, 3
  %v1122 = vrot.slane %v1078, 4
  %v1125 = vadd.f32 %v66, %v1121
  %v1126 = vadd.f32 %v68, %v1122
  %v1127 = vxor.u32 %v1125, 2147483648
  %v1128 = vxor.u32 %v1126, 2147483648
  %v1129 = vmul.f32 %v1127, 1.442695
  %v1130 = vpow.pop %v1129
  %v1131 = vmul.f32 %v1128, 1.442695
  %v1132 = vpow.pop %v1131
  %v1133 = vadd.f32 %v1130, 1.0
  %v1134 = vadd.f32 %v1132, 1.0
  %v1135 = vrcp.pop %v1133
  %v1136 = vmul.f32 %v1133, %v1135
  %v1137 = vsub.f32 1.0, %v1136
  %v1138 = vmul.f32 %v1135, %v1137
  %v1139 = vadd.f32 %v1135, %v1138
  %vm1140 = vweird.f32 %v1133
  %vm1141 = vweird.f32 %v1135
  %vm1142 = vmor %vm1140, %vm1141
  %v1143 = vsel %vm1142, %v1135, %v1139
  %v1144 = vand.u32 2147483647, %v1133
  %vm1145 = vcmp.eq.f32.partialorder %v1144, 8.507059e+37
  %v1146 = vand.u32 %v1133, 2147483648
  %v1147 = vor.u32 1.1754944e-38, %v1146
  %v1148 = vsel %vm1145, %v1147, %v1143
  %v1149 = vmul.f32 1.0, %v1148
  %v1150 = vrcp.pop %v1134
  %v1151 = vmul.f32 %v1134, %v1150
  %v1152 = vsub.f32 1.0, %v1151
  %v1153 = vmul.f32 %v1150, %v1152
  %v1154 = vadd.f32 %v1150, %v1153
  %vm1155 = vweird.f32 %v1134
  %vm1156 = vweird.f32 %v1150
  %vm1157 = vmor %vm1155, %vm1156
  %v1158 = vsel %vm1157, %v1150, %v1154
  %v1159 = vand.u32 2147483647, %v1134
  %vm1160 = vcmp.eq.f32.partialorder %v1159, 8.507059e+37
  %v1161 = vand.u32 %v1134, 2147483648
  %v1162 = vor.u32 1.1754944e-38, %v1161
  %v1163 = vsel %vm1160, %v1162, %v1158
  %v1164 = vmul.f32 1.0, %v1163
  %v1166 = vrot.slane %v1098, 3
  %v1167 = vrot.slane %v1098, 4
  %v1170 = vadd.f32 %v80, %v1166
  %v1171 = vadd.f32 %v82, %v1167
  %v1172 = vxor.u32 %v1170, 2147483648
  %v1173 = vxor.u32 %v1171, 2147483648
  %v1174 = vmul.f32 %v1172, 1.442695
  %v1175 = vpow.pop %v1174
  %v1176 = vmul.f32 %v1173, 1.442695
  %v1177 = vpow.pop %v1176
  %v1178 = vadd.f32 %v1175, 1.0
  %v1179 = vadd.f32 %v1177, 1.0
  %v1180 = vrcp.pop %v1178
  %v1181 = vmul.f32 %v1178, %v1180
  %v1182 = vsub.f32 1.0, %v1181
  %v1183 = vmul.f32 %v1180, %v1182
  %v1184 = vadd.f32 %v1180, %v1183
  %vm1185 = vweird.f32 %v1178
  %vm1186 = vweird.f32 %v1180
  %vm1187 = vmor %vm1185, %vm1186
  %v1188 = vsel %vm1187, %v1180, %v1184
  %v1189 = vand.u32 2147483647, %v1178
  %vm1190 = vcmp.eq.f32.partialorder %v1189, 8.507059e+37
  %v1191 = vand.u32 %v1178, 2147483648
  %v1192 = vor.u32 1.1754944e-38, %v1191
  %v1193 = vsel %vm1190, %v1192, %v1188
  %v1194 = vmul.f32 1.0, %v1193
  %v1195 = vrcp.pop %v1179
  %v1196 = vmul.f32 %v1179, %v1195
  %v1197 = vsub.f32 1.0, %v1196
  %v1198 = vmul.f32 %v1195, %v1197
  %v1199 = vadd.f32 %v1195, %v1198
  %vm1200 = vweird.f32 %v1179
  %vm1201 = vweird.f32 %v1195
  %vm1202 = vmor %vm1200, %vm1201
  %v1203 = vsel %vm1202, %v1195, %v1199
  %v1204 = vand.u32 2147483647, %v1179
  %vm1205 = vcmp.eq.f32.partialorder %v1204, 8.507059e+37
  %v1206 = vand.u32 %v1179, 2147483648
  %v1207 = vor.u32 1.1754944e-38, %v1206
  %v1208 = vsel %vm1205, %v1207, %v1203
  %v1209 = vmul.f32 1.0, %v1208
  %v1211 = vrot.slane %v1118, 3
  %v1212 = vrot.slane %v1118, 4
  %v1215 = vmul.f32 %v1149, %v1211
  %v1216 = vmul.f32 %v1164, %v1212
  %v1217 = vadd.f32 %v94, %v1215
  %v1218 = vadd.f32 %v96, %v1216
  %v1219 = vtanh.pop %v1217
  %v1220 = vtanh.pop %v1218
  %v1223 = vrot.slane %v1219, 1
  %v1224 = vrot.slane %v1220, 1
  %v1227 = vsub.f32 %v1052, %v1223
  %v1228 = vsub.f32 %v1053, %v1224
  %v1231 = vrot.slane %v1227, 7
  %v1232 = vrot.slane %v1228, 7
  %v1235 = vmul.f32 %v1194, %v1231
  %v1236 = vmul.f32 %v1209, %v1232
  %v1237 = vadd.f32 %v1219, %v1235
  %v1238 = vadd.f32 %v1220, %v1236
  %v1241 = vrot.slane %v1237, 5
  %v1242 = vrot.slane %v1238, 4
  %v1243 = vsel %vm321, %v1242, %v1241
  %1245 = vmatpush.msra.mxu0 %v143
  %1246 = vmatpush.msra.mxu0 %v140
  %1247 = vmatpush.msra.mxu0 %v137
  %1248 = vmatpush.msra.mxu0 %v134
  %1249 = vmatpush.msra.mxu0 %v131
  %1250 = vmatpush.msra.mxu0 %v128
  %1251 = vmatpush.msra.mxu0 %v125
  %1252 = vmatpush.msra.mxu0 %v122
  %1253 = vmatpush.msra.mxu0 %v119
  %1254 = vmatpush.msra.mxu0 %v116
  %1255 = vmatpush.msra.mxu0 %v113
  %1256 = vmatpush.msra.mxu0 %v110
  %1257 = vmatpush.msra.mxu0 %v107
  %1258 = vmatpush.msra.mxu0 %v104
  %1259 = vmatpush.msra.mxu0 %v101
  %1260 = vmatpush.msra.mxu0 %v98
  %1261 = vmatmul.f32.gmra.mxu0 %v1243
  %v1262 = vpop.f32.mrf.mxu0
  %v1263 = vadd.f32 %v148, %v1262
  %1264 = vdwg.mxu0
  %1265 = vmatpush.msra.mxu0 %v144
  %1266 = vmatpush.msra.mxu0 %v141
  %1267 = vmatpush.msra.mxu0 %v138
  %1268 = vmatpush.msra.mxu0 %v135
  %1269 = vmatpush.msra.mxu0 %v132
  %1270 = vmatpush.msra.mxu0 %v129
  %1271 = vmatpush.msra.mxu0 %v126
  %1272 = vmatpush.msra.mxu0 %v123
  %1273 = vmatpush.msra.mxu0 %v120
  %1274 = vmatpush.msra.mxu0 %v117
  %1275 = vmatpush.msra.mxu0 %v114
  %1276 = vmatpush.msra.mxu0 %v111
  %1277 = vmatpush.msra.mxu0 %v108
  %1278 = vmatpush.msra.mxu0 %v105
  %1279 = vmatpush.msra.mxu0 %v102
  %1280 = vmatpush.msra.mxu0 %v99
  %1281 = vmatmul.f32.gmra.mxu0 %v1243
  %v1282 = vpop.f32.mrf.mxu0
  %v1283 = vadd.f32 %v149, %v1282
  %1284 = vdwg.mxu0
  %1285 = vmatpush.msra.mxu0 %v145
  %1286 = vmatpush.msra.mxu0 %v142
  %1287 = vmatpush.msra.mxu0 %v139
  %1288 = vmatpush.msra.mxu0 %v136
  %1289 = vmatpush.msra.mxu0 %v133
  %1290 = vmatpush.msra.mxu0 %v130
  %1291 = vmatpush.msra.mxu0 %v127
  %1292 = vmatpush.msra.mxu0 %v124
  %1293 = vmatpush.msra.mxu0 %v121
  %1294 = vmatpush.msra.mxu0 %v118
  %1295 = vmatpush.msra.mxu0 %v115
  %1296 = vmatpush.msra.mxu0 %v112
  %1297 = vmatpush.msra.mxu0 %v109
  %1298 = vmatpush.msra.mxu0 %v106
  %1299 = vmatpush.msra.mxu0 %v103
  %1300 = vmatpush.msra.mxu0 %v100
  %1301 = vmatmul.f32.gmra.mxu0 %v1243
  %v1302 = vpop.f32.mrf.mxu0
  %v1303 = vadd.f32 %v150, %v1302
  %1304 = vdwg.mxu0
  %v1306 = vrot.slane %v1263, 2
  %v1307 = vrot.slane %v1263, 3
  %v1310 = vadd.f32 %v66, %v1306
  %v1311 = vadd.f32 %v68, %v1307
  %v1312 = vxor.u32 %v1310, 2147483648
  %v1313 = vxor.u32 %v1311, 2147483648
  %v1314 = vmul.f32 %v1312, 1.442695
  %v1315 = vpow.pop %v1314
  %v1316 = vmul.f32 %v1313, 1.442695
  %v1317 = vpow.pop %v1316
  %v1318 = vadd.f32 %v1315, 1.0
  %v1319 = vadd.f32 %v1317, 1.0
  %v1320 = vrcp.pop %v1318
  %v1321 = vmul.f32 %v1318, %v1320
  %v1322 = vsub.f32 1.0, %v1321
  %v1323 = vmul.f32 %v1320, %v1322
  %v1324 = vadd.f32 %v1320, %v1323
  %vm1325 = vweird.f32 %v1318
  %vm1326 = vweird.f32 %v1320
  %vm1327 = vmor %vm1325, %vm1326
  %v1328 = vsel %vm1327, %v1320, %v1324
  %v1329 = vand.u32 2147483647, %v1318
  %vm1330 = vcmp.eq.f32.partialorder %v1329, 8.507059e+37
  %v1331 = vand.u32 %v1318, 2147483648
  %v1332 = vor.u32 1.1754944e-38, %v1331
  %v1333 = vsel %vm1330, %v1332, %v1328
  %v1334 = vmul.f32 1.0, %v1333
  %v1335 = vrcp.pop %v1319
  %v1336 = vmul.f32 %v1319, %v1335
  %v1337 = vsub.f32 1.0, %v1336
  %v1338 = vmul.f32 %v1335, %v1337
  %v1339 = vadd.f32 %v1335, %v1338
  %vm1340 = vweird.f32 %v1319
  %vm1341 = vweird.f32 %v1335
  %vm1342 = vmor %vm1340, %vm1341
  %v1343 = vsel %vm1342, %v1335, %v1339
  %v1344 = vand.u32 2147483647, %v1319
  %vm1345 = vcmp.eq.f32.partialorder %v1344, 8.507059e+37
  %v1346 = vand.u32 %v1319, 2147483648
  %v1347 = vor.u32 1.1754944e-38, %v1346
  %v1348 = vsel %vm1345, %v1347, %v1343
  %v1349 = vmul.f32 1.0, %v1348
  %v1351 = vrot.slane %v1283, 2
  %v1352 = vrot.slane %v1283, 3
  %v1355 = vadd.f32 %v80, %v1351
  %v1356 = vadd.f32 %v82, %v1352
  %v1357 = vxor.u32 %v1355, 2147483648
  %v1358 = vxor.u32 %v1356, 2147483648
  %v1359 = vmul.f32 %v1357, 1.442695
  %v1360 = vpow.pop %v1359
  %v1361 = vmul.f32 %v1358, 1.442695
  %v1362 = vpow.pop %v1361
  %v1363 = vadd.f32 %v1360, 1.0
  %v1364 = vadd.f32 %v1362, 1.0
  %v1365 = vrcp.pop %v1363
  %v1366 = vmul.f32 %v1363, %v1365
  %v1367 = vsub.f32 1.0, %v1366
  %v1368 = vmul.f32 %v1365, %v1367
  %v1369 = vadd.f32 %v1365, %v1368
  %vm1370 = vweird.f32 %v1363
  %vm1371 = vweird.f32 %v1365
  %vm1372 = vmor %vm1370, %vm1371
  %v1373 = vsel %vm1372, %v1365, %v1369
  %v1374 = vand.u32 2147483647, %v1363
  %vm1375 = vcmp.eq.f32.partialorder %v1374, 8.507059e+37
  %v1376 = vand.u32 %v1363, 2147483648
  %v1377 = vor.u32 1.1754944e-38, %v1376
  %v1378 = vsel %vm1375, %v1377, %v1373
  %v1379 = vmul.f32 1.0, %v1378
  %v1380 = vrcp.pop %v1364
  %v1381 = vmul.f32 %v1364, %v1380
  %v1382 = vsub.f32 1.0, %v1381
  %v1383 = vmul.f32 %v1380, %v1382
  %v1384 = vadd.f32 %v1380, %v1383
  %vm1385 = vweird.f32 %v1364
  %vm1386 = vweird.f32 %v1380
  %vm1387 = vmor %vm1385, %vm1386
  %v1388 = vsel %vm1387, %v1380, %v1384
  %v1389 = vand.u32 2147483647, %v1364
  %vm1390 = vcmp.eq.f32.partialorder %v1389, 8.507059e+37
  %v1391 = vand.u32 %v1364, 2147483648
  %v1392 = vor.u32 1.1754944e-38, %v1391
  %v1393 = vsel %vm1390, %v1392, %v1388
  %v1394 = vmul.f32 1.0, %v1393
  %v1396 = vrot.slane %v1303, 2
  %v1397 = vrot.slane %v1303, 3
  %v1400 = vmul.f32 %v1334, %v1396
  %v1401 = vmul.f32 %v1349, %v1397
  %v1402 = vadd.f32 %v94, %v1400
  %v1403 = vadd.f32 %v96, %v1401
  %v1404 = vtanh.pop %v1402
  %v1405 = vtanh.pop %v1403
  %v1408 = vrot.slane %v1404, 1
  %v1409 = vrot.slane %v1405, 1
  %v1412 = vsub.f32 %v1237, %v1408
  %v1413 = vsub.f32 %v1238, %v1409
  %v1416 = vrot.slane %v1412, 7
  %v1417 = vrot.slane %v1413, 7
  %v1420 = vmul.f32 %v1379, %v1416
  %v1421 = vmul.f32 %v1394, %v1417
  %v1422 = vadd.f32 %v1404, %v1420
  %v1423 = vadd.f32 %v1405, %v1421
  %v1426 = vrot.slane %v1422, 6
  %v1427 = vrot.slane %v1423, 5
  %v1428 = vsel %vm321, %v1427, %v1426
  %1430 = vmatpush.msra.mxu0 %v143
  %1431 = vmatpush.msra.mxu0 %v140
  %1432 = vmatpush.msra.mxu0 %v137
  %1433 = vmatpush.msra.mxu0 %v134
  %1434 = vmatpush.msra.mxu0 %v131
  %1435 = vmatpush.msra.mxu0 %v128
  %1436 = vmatpush.msra.mxu0 %v125
  %1437 = vmatpush.msra.mxu0 %v122
  %1438 = vmatpush.msra.mxu0 %v119
  %1439 = vmatpush.msra.mxu0 %v116
  %1440 = vmatpush.msra.mxu0 %v113
  %1441 = vmatpush.msra.mxu0 %v110
  %1442 = vmatpush.msra.mxu0 %v107
  %1443 = vmatpush.msra.mxu0 %v104
  %1444 = vmatpush.msra.mxu0 %v101
  %1445 = vmatpush.msra.mxu0 %v98
  %1446 = vmatmul.f32.gmra.mxu0 %v1428
  %v1447 = vpop.f32.mrf.mxu0
  %v1448 = vadd.f32 %v148, %v1447
  %1449 = vdwg.mxu0
  %1450 = vmatpush.msra.mxu0 %v144
  %1451 = vmatpush.msra.mxu0 %v141
  %1452 = vmatpush.msra.mxu0 %v138
  %1453 = vmatpush.msra.mxu0 %v135
  %1454 = vmatpush.msra.mxu0 %v132
  %1455 = vmatpush.msra.mxu0 %v129
  %1456 = vmatpush.msra.mxu0 %v126
  %1457 = vmatpush.msra.mxu0 %v123
  %1458 = vmatpush.msra.mxu0 %v120
  %1459 = vmatpush.msra.mxu0 %v117
  %1460 = vmatpush.msra.mxu0 %v114
  %1461 = vmatpush.msra.mxu0 %v111
  %1462 = vmatpush.msra.mxu0 %v108
  %1463 = vmatpush.msra.mxu0 %v105
  %1464 = vmatpush.msra.mxu0 %v102
  %1465 = vmatpush.msra.mxu0 %v99
  %1466 = vmatmul.f32.gmra.mxu0 %v1428
  %v1467 = vpop.f32.mrf.mxu0
  %v1468 = vadd.f32 %v149, %v1467
  %1469 = vdwg.mxu0
  %1470 = vmatpush.msra.mxu0 %v145
  %1471 = vmatpush.msra.mxu0 %v142
  %1472 = vmatpush.msra.mxu0 %v139
  %1473 = vmatpush.msra.mxu0 %v136
  %1474 = vmatpush.msra.mxu0 %v133
  %1475 = vmatpush.msra.mxu0 %v130
  %1476 = vmatpush.msra.mxu0 %v127
  %1477 = vmatpush.msra.mxu0 %v124
  %1478 = vmatpush.msra.mxu0 %v121
  %1479 = vmatpush.msra.mxu0 %v118
  %1480 = vmatpush.msra.mxu0 %v115
  %1481 = vmatpush.msra.mxu0 %v112
  %1482 = vmatpush.msra.mxu0 %v109
  %1483 = vmatpush.msra.mxu0 %v106
  %1484 = vmatpush.msra.mxu0 %v103
  %1485 = vmatpush.msra.mxu0 %v100
  %1486 = vmatmul.f32.gmra.mxu0 %v1428
  %v1487 = vpop.f32.mrf.mxu0
  %v1488 = vadd.f32 %v150, %v1487
  %1489 = vdwg.mxu0
  %v1491 = vrot.slane %v1448, 1
  %v1492 = vrot.slane %v1448, 2
  %v1495 = vadd.f32 %v66, %v1491
  %v1496 = vadd.f32 %v68, %v1492
  %v1497 = vxor.u32 %v1495, 2147483648
  %v1498 = vxor.u32 %v1496, 2147483648
  %v1499 = vmul.f32 %v1497, 1.442695
  %v1500 = vpow.pop %v1499
  %v1501 = vmul.f32 %v1498, 1.442695
  %v1502 = vpow.pop %v1501
  %v1503 = vadd.f32 %v1500, 1.0
  %v1504 = vadd.f32 %v1502, 1.0
  %v1505 = vrcp.pop %v1503
  %v1506 = vmul.f32 %v1503, %v1505
  %v1507 = vsub.f32 1.0, %v1506
  %v1508 = vmul.f32 %v1505, %v1507
  %v1509 = vadd.f32 %v1505, %v1508
  %vm1510 = vweird.f32 %v1503
  %vm1511 = vweird.f32 %v1505
  %vm1512 = vmor %vm1510, %vm1511
  %v1513 = vsel %vm1512, %v1505, %v1509
  %v1514 = vand.u32 2147483647, %v1503
  %vm1515 = vcmp.eq.f32.partialorder %v1514, 8.507059e+37
  %v1516 = vand.u32 %v1503, 2147483648
  %v1517 = vor.u32 1.1754944e-38, %v1516
  %v1518 = vsel %vm1515, %v1517, %v1513
  %v1519 = vmul.f32 1.0, %v1518
  %v1520 = vrcp.pop %v1504
  %v1521 = vmul.f32 %v1504, %v1520
  %v1522 = vsub.f32 1.0, %v1521
  %v1523 = vmul.f32 %v1520, %v1522
  %v1524 = vadd.f32 %v1520, %v1523
  %vm1525 = vweird.f32 %v1504
  %vm1526 = vweird.f32 %v1520
  %vm1527 = vmor %vm1525, %vm1526
  %v1528 = vsel %vm1527, %v1520, %v1524
  %v1529 = vand.u32 2147483647, %v1504
  %vm1530 = vcmp.eq.f32.partialorder %v1529, 8.507059e+37
  %v1531 = vand.u32 %v1504, 2147483648
  %v1532 = vor.u32 1.1754944e-38, %v1531
  %v1533 = vsel %vm1530, %v1532, %v1528
  %v1534 = vmul.f32 1.0, %v1533
  %v1536 = vrot.slane %v1468, 1
  %v1537 = vrot.slane %v1468, 2
  %v1540 = vadd.f32 %v80, %v1536
  %v1541 = vadd.f32 %v82, %v1537
  %v1542 = vxor.u32 %v1540, 2147483648
  %v1543 = vxor.u32 %v1541, 2147483648
  %v1544 = vmul.f32 %v1542, 1.442695
  %v1545 = vpow.pop %v1544
  %v1546 = vmul.f32 %v1543, 1.442695
  %v1547 = vpow.pop %v1546
  %v1548 = vadd.f32 %v1545, 1.0
  %v1549 = vadd.f32 %v1547, 1.0
  %v1550 = vrcp.pop %v1548
  %v1551 = vmul.f32 %v1548, %v1550
  %v1552 = vsub.f32 1.0, %v1551
  %v1553 = vmul.f32 %v1550, %v1552
  %v1554 = vadd.f32 %v1550, %v1553
  %vm1555 = vweird.f32 %v1548
  %vm1556 = vweird.f32 %v1550
  %vm1557 = vmor %vm1555, %vm1556
  %v1558 = vsel %vm1557, %v1550, %v1554
  %v1559 = vand.u32 2147483647, %v1548
  %vm1560 = vcmp.eq.f32.partialorder %v1559, 8.507059e+37
  %v1561 = vand.u32 %v1548, 2147483648
  %v1562 = vor.u32 1.1754944e-38, %v1561
  %v1563 = vsel %vm1560, %v1562, %v1558
  %v1564 = vmul.f32 1.0, %v1563
  %v1565 = vrcp.pop %v1549
  %v1566 = vmul.f32 %v1549, %v1565
  %v1567 = vsub.f32 1.0, %v1566
  %v1568 = vmul.f32 %v1565, %v1567
  %v1569 = vadd.f32 %v1565, %v1568
  %vm1570 = vweird.f32 %v1549
  %vm1571 = vweird.f32 %v1565
  %vm1572 = vmor %vm1570, %vm1571
  %v1573 = vsel %vm1572, %v1565, %v1569
  %v1574 = vand.u32 2147483647, %v1549
  %vm1575 = vcmp.eq.f32.partialorder %v1574, 8.507059e+37
  %v1576 = vand.u32 %v1549, 2147483648
  %v1577 = vor.u32 1.1754944e-38, %v1576
  %v1578 = vsel %vm1575, %v1577, %v1573
  %v1579 = vmul.f32 1.0, %v1578
  %v1581 = vrot.slane %v1488, 1
  %v1582 = vrot.slane %v1488, 2
  %v1585 = vmul.f32 %v1519, %v1581
  %v1586 = vmul.f32 %v1534, %v1582
  %v1587 = vadd.f32 %v94, %v1585
  %v1588 = vadd.f32 %v96, %v1586
  %v1589 = vtanh.pop %v1587
  %v1590 = vtanh.pop %v1588
  %v1593 = vrot.slane %v1589, 1
  %v1594 = vrot.slane %v1590, 1
  %v1597 = vsub.f32 %v1422, %v1593
  %v1598 = vsub.f32 %v1423, %v1594
  %v1601 = vrot.slane %v1597, 7
  %v1602 = vrot.slane %v1598, 7
  %v1605 = vmul.f32 %v1564, %v1601
  %v1606 = vmul.f32 %v1579, %v1602
  %v1607 = vadd.f32 %v1589, %v1605
  %v1608 = vadd.f32 %v1590, %v1606
  %1609 = vrot.lane.b32.xlu0 %v503, 32
  %v1610 = vpop.permute.xlu0 %1609
  %1612 = vrot.lane.b32.xlu0 %v688, 64
  %v1613 = vpop.permute.xlu0 %1612
  %1615 = vrot.lane.b32.xlu0 %v873, 96
  %v1616 = vpop.permute.xlu0 %1615
  %1618 = vrot.lane.b32.xlu0 %v1243, 32
  %v1619 = vpop.permute.xlu0 %1618
  %1621 = vrot.lane.b32.xlu0 %v1428, 64
  %v1622 = vpop.permute.xlu0 %1621
  %v1626 = vrot.slane %v1607, 7
  %v1627 = vrot.slane %v1608, 6
  %v1628 = vsel %vm321, %v1627, %v1626
  %1629 = vrot.lane.b32.xlu0 %v1628, 96
  %v1630 = vpop.permute.xlu0 %1629
  %vm1632 = vcmask 261120
  %v1633 = vsel %vm1632, %v322, %v1610
  %vm1634 = vcmask 523264
  %v1635 = vsel %vm1634, %v1633, %v1613
  %vm1636 = vcmask 785408
  %v1637 = vsel %vm1636, %v1635, %v1616
  %v1638 = vsel %vm1632, %v1058, %v1619
  %v1639 = vsel %vm1634, %v1638, %v1622
  %v1640 = vsel %vm1636, %v1639, %v1630
  %v1643 = vrot.slane %v1640, 6
  %vm1644 = vcmask 1041408
  %v1645 = vsel %vm1644, %v1637, %v1643
  %1647 = vst [vmem:[%s5] sm:$0xf] %v1645
  // Predicated region
  $region22: #{gru_encoder_forward.1} parent=0 // pred_check
    _
  $region23: #{gru_encoder_forward.1} parent=0 // pred_check_branch
    %1649 = sbr.rel (0) target = $region25
  $region24: #{gru_encoder_forward.1} parent=0 // pred_region
    _
  $region25: #{gru_encoder_forward.1} parent=0 // pred_fallthru
    _
  // Predicated region
  $region26: #{gru_encoder_forward.1} parent=0 // pred_check
    _
  $region27: #{gru_encoder_forward.1} parent=0 // pred_check_branch
    %1651 = sbr.rel (0) target = $region29
  $region28: #{gru_encoder_forward.1} parent=0 // pred_region
    _
  $region29: #{gru_encoder_forward.1} parent=0 // pred_fallthru
    _

</llo_original>
